<compile_context>
chip_gen: v7x
topology: tpu7x:2x2x1
jax: 0.10.0
libtpu: 0.0.40
codegen_flags: <defaults>
</compile_context>

<pallas_src>
import jax
import jax.numpy as jnp
from jax.experimental import pallas as pl
from jax.experimental.pallas import tpu as pltpu


_LANE = 128


def _round_up(n, m):
    return -(-n // m) * m


# --------------------------------------------------------------------------------------
# Kernel
# --------------------------------------------------------------------------------------
def residual_mlp_kernel(
    x_ref,
    w_in_ref, b_in_ref,
    w1a_ref, b1a_ref, w1b_ref, b1b_ref,
    w2a_ref, b2a_ref, w2b_ref, b2b_ref,
    w_out_ref, b_out_ref,
    o_ref,
):
    bf16 = jnp.bfloat16

    # input_layer + relu (x_ref is already bf16); keep inter-layer activations in bf16.
    h = jnp.dot(x_ref[...], w_in_ref[...], preferred_element_type=jnp.float32)
    h = jnp.maximum(h + b_in_ref[...], 0.0).astype(bf16)

    # res_block1: fc1 -> relu -> (dropout = identity) -> fc2 -> +residual -> relu
    r = h
    t = jnp.dot(h, w1a_ref[...], preferred_element_type=jnp.float32)
    t = jnp.maximum(t + b1a_ref[...], 0.0).astype(bf16)
    t = jnp.dot(t, w1b_ref[...], preferred_element_type=jnp.float32) + b1b_ref[...]
    h = jnp.maximum(t + r.astype(jnp.float32), 0.0).astype(bf16)

    # res_block2
    r = h
    t = jnp.dot(h, w2a_ref[...], preferred_element_type=jnp.float32)
    t = jnp.maximum(t + b2a_ref[...], 0.0).astype(bf16)
    t = jnp.dot(t, w2b_ref[...], preferred_element_type=jnp.float32) + b2b_ref[...]
    h = jnp.maximum(t + r.astype(jnp.float32), 0.0).astype(bf16)

    # output_layer (no activation); output block is lane-dense (padded to 128)
    out = jnp.dot(h, w_out_ref[...], preferred_element_type=jnp.float32) + b_out_ref[...]
    o_ref[...] = out.astype(o_ref.dtype)


# --------------------------------------------------------------------------------------
# Wrapper helpers
# --------------------------------------------------------------------------------------
def _full_spec(arr, single_buffer=True):
    """Whole-array block, constant index map (VMEM-resident across the whole grid)."""
    ndim = arr.ndim
    idx = lambda i, _n=ndim: (0,) * _n
    if single_buffer:
        # Constant index -> DMA'd once; Buffered(1) avoids a dead second VMEM copy.
        return pl.BlockSpec(arr.shape, idx, pipeline_mode=pl.Buffered(1))
    return pl.BlockSpec(arr.shape, idx)


def _vmem_capacity_bytes():
    try:
        return int(pltpu.get_tpu_info().vmem_capacity_bytes)
    except Exception:
        return 64 << 20  # conservative (v7x-sized) fallback


def _has_multiple_tensorcores():
    """True on chips that expose >1 TensorCore per device (v7x, v4/v5p megacore)."""
    try:
        kind = jax.devices()[0].device_kind.lower()
    except Exception:
        return False
    return any(tag in kind for tag in ("v7", "7x", "v4", "v5p"))


def _choose_tile_b(B, max_tile_b, multi_tc):
    """Pick a batch tile that minimizes padding; split for a 2nd TC only when it exists."""
    B8 = _round_up(B, 8)
    if B8 <= 128:
        return min(B8, _round_up(max(max_tile_b, 8), 8))
    cands = [c for c in (512, 384, 256, 128) if c <= max_tile_b]
    if not cands:
        cands = [_round_up(min(max_tile_b, 128), 8)]
    # minimize padded rows; tie-break toward the larger tile (fewer grid steps)
    tile_b = min(cands, key=lambda c: (_round_up(B8, c) - B8, -c))
    if multi_tc:
        # give the second TensorCore a grid step, but never drop below 256 rows (MXU M dim)
        while _round_up(B8, tile_b) // tile_b < 2 and tile_b >= 512:
            tile_b //= 2
    return tile_b


def pack_params(params):
    """Pad + cast parameters once (hoisted out of the per-forward wrapper).

    Zero padding is exact for this network: padded activation columns stay 0 through every
    ReLU / residual add, and padded output columns are sliced off after the kernel.
    """
    D_in, H = params["w_in"].shape
    C = params["w_out"].shape[1]
    D_pad = _round_up(D_in, _LANE)
    H_pad = _round_up(H, _LANE)
    C_pad = _round_up(C, _LANE)

    bf16 = jnp.bfloat16

    def pad_w(w, rows, cols):
        return jnp.zeros((rows, cols), bf16).at[: w.shape[0], : w.shape[1]].set(w.astype(bf16))

    def pad_b(b, cols):
        return jnp.zeros((1, cols), jnp.float32).at[:, : b.shape[1]].set(b.astype(jnp.float32))

    weights = (
        pad_w(params["w_in"], D_pad, H_pad), pad_b(params["b_in"], H_pad),
        pad_w(params["w1a"], H_pad, H_pad), pad_b(params["b1a"], H_pad),
        pad_w(params["w1b"], H_pad, H_pad), pad_b(params["b1b"], H_pad),
        pad_w(params["w2a"], H_pad, H_pad), pad_b(params["b2a"], H_pad),
        pad_w(params["w2b"], H_pad, H_pad), pad_b(params["b2b"], H_pad),
        pad_w(params["w_out"], H_pad, C_pad), pad_b(params["b_out"], C_pad),
    )
    dims = dict(D_in=D_in, D_pad=D_pad, H=H, H_pad=H_pad, C=C, C_pad=C_pad)
    return {"weights": weights, "dims": dims}


# --------------------------------------------------------------------------------------
# Forward
# --------------------------------------------------------------------------------------
def residual_mlp(x, packed, *, max_tile_b=512, out_dtype=jnp.bfloat16):
    """x: (B, input_dim) float32.  packed: result of pack_params()."""
    dims = packed["dims"]
    weights = packed["weights"]
    D_in, D_pad = dims["D_in"], dims["D_pad"]
    H_pad = dims["H_pad"]
    C, C_pad = dims["C"], dims["C_pad"]

    B = x.shape[0]
    assert x.shape[1] == D_in

    out_itemsize = jnp.dtype(out_dtype).itemsize
    weight_bytes = sum(int(a.size) * a.dtype.itemsize for a in weights)

    vmem_cap = _vmem_capacity_bytes()
    vmem_budget = int(vmem_cap * 0.85)  # leave pipeline/compiler headroom

    def vmem_needed(tb, weight_buffers=1):
        return (
            weight_buffers * weight_bytes      # weight copies resident in VMEM
            + 2 * tb * D_pad * 2               # x tile, double-buffered bf16
            + 2 * tb * C_pad * out_itemsize    # out tile, double-buffered
            + 6 * tb * H_pad * 4               # f32 accumulators / activation spill headroom
            + (2 << 20)                        # misc scratch
        )

    tile_b = _choose_tile_b(B, max_tile_b, _has_multiple_tensorcores())
    while tile_b > 8 and vmem_needed(tile_b) > vmem_budget:
        tile_b = max(8, _round_up(tile_b // 2, 8))
    if vmem_needed(tile_b) > vmem_budget:
        # TODO(synk): for very large hidden dims, tile the HxH matmuls over an
        # output-feature grid axis instead of holding all weights VMEM-resident.
        raise NotImplementedError(
            f"hidden_dim too large for the fully fused kernel: needs "
            f"{vmem_needed(tile_b)} B of VMEM, budget is {vmem_budget} B"
        )

    B_pad = _round_up(B, tile_b)
    grid_b = B_pad // tile_b

    # Only the activation is padded per call; weights were packed once.
    x_p = jnp.zeros((B_pad, D_pad), jnp.bfloat16).at[:B, :D_in].set(x.astype(jnp.bfloat16))

    flops = 2 * B_pad * (D_pad * H_pad + 4 * H_pad * H_pad + H_pad * C_pad)
    bytes_accessed = (
        x_p.size * x_p.dtype.itemsize + weight_bytes + B_pad * C_pad * out_itemsize
    )
    cost = pl.CostEstimate(
        flops=int(flops), transcendentals=0, bytes_accessed=int(bytes_accessed)
    )

    def build(single_buffer_weights):
        weight_buffers = 1 if single_buffer_weights else 2
        vmem_limit = min(
            max(vmem_needed(tile_b, weight_buffers), 32 << 20), vmem_budget
        )
        grid_spec = pltpu.PrefetchScalarGridSpec(
            num_scalar_prefetch=0,
            grid=(grid_b,),
            in_specs=[pl.BlockSpec((tile_b, D_pad), lambda i: (i, 0))]
            + [_full_spec(a, single_buffer_weights) for a in weights],
            out_specs=pl.BlockSpec((tile_b, C_pad), lambda i: (i, 0)),
        )
        return pl.pallas_call(
            residual_mlp_kernel,
            out_shape=jax.ShapeDtypeStruct((B_pad, C_pad), out_dtype),
            grid_spec=grid_spec,
            compiler_params=pltpu.CompilerParams(
                dimension_semantics=("parallel",),
                vmem_limit_bytes=int(vmem_limit),
            ),
            cost_estimate=cost,
        )

    try:
        out = build(True)(x_p, *weights)
    except Exception:
        # Graceful fallback if this jax version rejects single-buffered pipeline_mode.
        out = build(False)(x_p, *weights)

    return out[:B, :C]


# --------------------------------------------------------------------------------------
# Init + reference
# --------------------------------------------------------------------------------------
def init_params(key, input_dim, hidden_dim, num_classes):
    """Deterministic parameter init. Weights stored transposed: (in, out), f32."""
    ks = jax.random.split(key, 12)

    def lin(kw, kb, fan_in, fan_out):
        bound = 1.0 / jnp.sqrt(fan_in)
        w = jax.random.uniform(kw, (fan_in, fan_out), jnp.float32, -bound, bound)
        b = jax.random.uniform(kb, (1, fan_out), jnp.float32, -bound, bound)
        return w, b

    p = {}
    p["w_in"], p["b_in"] = lin(ks[0], ks[1], input_dim, hidden_dim)
    p["w1a"], p["b1a"] = lin(ks[2], ks[3], hidden_dim, hidden_dim)
    p["w1b"], p["b1b"] = lin(ks[4], ks[5], hidden_dim, hidden_dim)
    p["w2a"], p["b2a"] = lin(ks[6], ks[7], hidden_dim, hidden_dim)
    p["w2b"], p["b2b"] = lin(ks[8], ks[9], hidden_dim, hidden_dim)
    p["w_out"], p["b_out"] = lin(ks[10], ks[11], hidden_dim, num_classes)
    return p


def residual_mlp_ref(x, p):
    """Pure-JAX f32 reference matching the PyTorch forward (dropout = identity)."""
    h = jnp.maximum(x @ p["w_in"] + p["b_in"], 0.0)
    r = h
    t = jnp.maximum(h @ p["w1a"] + p["b1a"], 0.0)
    h = jnp.maximum(t @ p["w1b"] + p["b1b"] + r, 0.0)
    r = h
    t = jnp.maximum(h @ p["w2a"] + p["b2a"], 0.0)
    h = jnp.maximum(t @ p["w2b"] + p["b2b"] + r, 0.0)
    return h @ p["w_out"] + p["b_out"]


if __name__ == "__main__":
    key = jax.random.PRNGKey(0)
    k_x, k_p = jax.random.split(key)

    B, INPUT_DIM, HIDDEN_DIM, NUM_CLASSES = 8, 32, 128, 10

    x = jax.random.normal(k_x, (B, INPUT_DIM), jnp.float32)
    params = init_params(k_p, INPUT_DIM, HIDDEN_DIM, NUM_CLASSES)
    packed = pack_params(params)  # padded + bf16-cast once, reused across forwards

    out = residual_mlp(x, packed)
    out = jax.block_until_ready(out)

    ref = residual_mlp_ref(x, params)
    assert out.shape == (B, NUM_CLASSES)
    # bf16 MXU operands, bf16 activations/output, f32 accumulation -> loosened tolerance.
    out_f32 = out.astype(jnp.float32)
    assert jnp.allclose(out_f32, ref, atol=5e-2, rtol=5e-2), (
        float(jnp.max(jnp.abs(out_f32 - ref)))
    )

    print("KERNEL_OK")
</pallas_src>

<mosaic_0001>
module attributes {stable_mosaic.version = 11 : i64} {
  func.func @residual_mlp_kernel(%arg0: i32, %arg1: memref<8x128xbf16, #tpu.memory_space<vmem>>, %arg2: memref<128x128xbf16, #tpu.memory_space<vmem>>, %arg3: memref<1x128xf32, #tpu.memory_space<vmem>>, %arg4: memref<128x128xbf16, #tpu.memory_space<vmem>>, %arg5: memref<1x128xf32, #tpu.memory_space<vmem>>, %arg6: memref<128x128xbf16, #tpu.memory_space<vmem>>, %arg7: memref<1x128xf32, #tpu.memory_space<vmem>>, %arg8: memref<128x128xbf16, #tpu.memory_space<vmem>>, %arg9: memref<1x128xf32, #tpu.memory_space<vmem>>, %arg10: memref<128x128xbf16, #tpu.memory_space<vmem>>, %arg11: memref<1x128xf32, #tpu.memory_space<vmem>>, %arg12: memref<128x128xbf16, #tpu.memory_space<vmem>>, %arg13: memref<1x128xf32, #tpu.memory_space<vmem>>, %arg14: memref<8x128xbf16, #tpu.memory_space<vmem>>) attributes {dimension_semantics = [#tpu.dimension_semantics<parallel>], iteration_bounds = array<i64: 1>, scalar_prefetch = 0 : i64, scratch_operands = 0 : i64, tpu.core_type = #tpu.core_type<tc>, window_params = [{transform_indices = @transform_0, window_bounds = array<i64: 8, 128>}, {pipeline_mode = #tpu.pipeline_mode<synchronous>, transform_indices = @transform_1, window_bounds = array<i64: 128, 128>}, {pipeline_mode = #tpu.pipeline_mode<synchronous>, transform_indices = @transform_2, window_bounds = array<i64: 1, 128>}, {pipeline_mode = #tpu.pipeline_mode<synchronous>, transform_indices = @transform_3, window_bounds = array<i64: 128, 128>}, {pipeline_mode = #tpu.pipeline_mode<synchronous>, transform_indices = @transform_4, window_bounds = array<i64: 1, 128>}, {pipeline_mode = #tpu.pipeline_mode<synchronous>, transform_indices = @transform_5, window_bounds = array<i64: 128, 128>}, {pipeline_mode = #tpu.pipeline_mode<synchronous>, transform_indices = @transform_6, window_bounds = array<i64: 1, 128>}, {pipeline_mode = #tpu.pipeline_mode<synchronous>, transform_indices = @transform_7, window_bounds = array<i64: 128, 128>}, {pipeline_mode = #tpu.pipeline_mode<synchronous>, transform_indices = @transform_8, window_bounds = array<i64: 1, 128>}, {pipeline_mode = #tpu.pipeline_mode<synchronous>, transform_indices = @transform_9, window_bounds = array<i64: 128, 128>}, {pipeline_mode = #tpu.pipeline_mode<synchronous>, transform_indices = @transform_10, window_bounds = array<i64: 1, 128>}, {pipeline_mode = #tpu.pipeline_mode<synchronous>, transform_indices = @transform_11, window_bounds = array<i64: 128, 128>}, {pipeline_mode = #tpu.pipeline_mode<synchronous>, transform_indices = @transform_12, window_bounds = array<i64: 1, 128>}, {transform_indices = @transform_13, window_bounds = array<i64: 8, 128>}]} {
    %c0 = arith.constant 0 : index
    %c0_0 = arith.constant 0 : index
    %0 = vector.load %arg1[%c0, %c0_0] : memref<8x128xbf16, #tpu.memory_space<vmem>>, vector<8x128xbf16>
    %c0_1 = arith.constant 0 : index
    %c0_2 = arith.constant 0 : index
    %1 = vector.load %arg2[%c0_1, %c0_2] : memref<128x128xbf16, #tpu.memory_space<vmem>>, vector<128x128xbf16>
    %cst = arith.constant dense<0.000000e+00> : vector<8x128xf32>
    %2 = tpu.matmul %0, %1, %cst {dimension_numbers = #tpu.dot_dimension_numbers<[1], [0], [0], [1], [0, 0, 1, 1], [], []>} : vector<8x128xbf16>, vector<128x128xbf16>, vector<8x128xf32> -> vector<8x128xf32>
    %c0_3 = arith.constant 0 : index
    %c0_4 = arith.constant 0 : index
    %3 = vector.load %arg3[%c0_3, %c0_4] : memref<1x128xf32, #tpu.memory_space<vmem>>, vector<1x128xf32>
    %4 = vector.broadcast %3 : vector<1x128xf32> to vector<8x128xf32>
    %5 = arith.addf %2, %4 : vector<8x128xf32>
    %cst_5 = arith.constant 0.000000e+00 : f32
    %6 = vector.broadcast %cst_5 : f32 to vector<8x128xf32>
    %7 = arith.maximumf %5, %6 : vector<8x128xf32>
    %8 = arith.truncf %7 : vector<8x128xf32> to vector<8x128xbf16>
    %c0_6 = arith.constant 0 : index
    %c0_7 = arith.constant 0 : index
    %9 = vector.load %arg4[%c0_6, %c0_7] : memref<128x128xbf16, #tpu.memory_space<vmem>>, vector<128x128xbf16>
    %cst_8 = arith.constant dense<0.000000e+00> : vector<8x128xf32>
    %10 = tpu.matmul %8, %9, %cst_8 {dimension_numbers = #tpu.dot_dimension_numbers<[1], [0], [0], [1], [0, 0, 1, 1], [], []>} : vector<8x128xbf16>, vector<128x128xbf16>, vector<8x128xf32> -> vector<8x128xf32>
    %c0_9 = arith.constant 0 : index
    %c0_10 = arith.constant 0 : index
    %11 = vector.load %arg5[%c0_9, %c0_10] : memref<1x128xf32, #tpu.memory_space<vmem>>, vector<1x128xf32>
    %12 = vector.broadcast %11 : vector<1x128xf32> to vector<8x128xf32>
    %13 = arith.addf %10, %12 : vector<8x128xf32>
    %cst_11 = arith.constant 0.000000e+00 : f32
    %14 = vector.broadcast %cst_11 : f32 to vector<8x128xf32>
    %15 = arith.maximumf %13, %14 : vector<8x128xf32>
    %16 = arith.truncf %15 : vector<8x128xf32> to vector<8x128xbf16>
    %c0_12 = arith.constant 0 : index
    %c0_13 = arith.constant 0 : index
    %17 = vector.load %arg6[%c0_12, %c0_13] : memref<128x128xbf16, #tpu.memory_space<vmem>>, vector<128x128xbf16>
    %cst_14 = arith.constant dense<0.000000e+00> : vector<8x128xf32>
    %18 = tpu.matmul %16, %17, %cst_14 {dimension_numbers = #tpu.dot_dimension_numbers<[1], [0], [0], [1], [0, 0, 1, 1], [], []>} : vector<8x128xbf16>, vector<128x128xbf16>, vector<8x128xf32> -> vector<8x128xf32>
    %c0_15 = arith.constant 0 : index
    %c0_16 = arith.constant 0 : index
    %19 = vector.load %arg7[%c0_15, %c0_16] : memref<1x128xf32, #tpu.memory_space<vmem>>, vector<1x128xf32>
    %20 = vector.broadcast %19 : vector<1x128xf32> to vector<8x128xf32>
    %21 = arith.addf %18, %20 : vector<8x128xf32>
    %22 = arith.extf %8 : vector<8x128xbf16> to vector<8x128xf32>
    %23 = arith.addf %21, %22 : vector<8x128xf32>
    %cst_17 = arith.constant 0.000000e+00 : f32
    %24 = vector.broadcast %cst_17 : f32 to vector<8x128xf32>
    %25 = arith.maximumf %23, %24 : vector<8x128xf32>
    %26 = arith.truncf %25 : vector<8x128xf32> to vector<8x128xbf16>
    %c0_18 = arith.constant 0 : index
    %c0_19 = arith.constant 0 : index
    %27 = vector.load %arg8[%c0_18, %c0_19] : memref<128x128xbf16, #tpu.memory_space<vmem>>, vector<128x128xbf16>
    %cst_20 = arith.constant dense<0.000000e+00> : vector<8x128xf32>
    %28 = tpu.matmul %26, %27, %cst_20 {dimension_numbers = #tpu.dot_dimension_numbers<[1], [0], [0], [1], [0, 0, 1, 1], [], []>} : vector<8x128xbf16>, vector<128x128xbf16>, vector<8x128xf32> -> vector<8x128xf32>
    %c0_21 = arith.constant 0 : index
    %c0_22 = arith.constant 0 : index
    %29 = vector.load %arg9[%c0_21, %c0_22] : memref<1x128xf32, #tpu.memory_space<vmem>>, vector<1x128xf32>
    %30 = vector.broadcast %29 : vector<1x128xf32> to vector<8x128xf32>
    %31 = arith.addf %28, %30 : vector<8x128xf32>
    %cst_23 = arith.constant 0.000000e+00 : f32
    %32 = vector.broadcast %cst_23 : f32 to vector<8x128xf32>
    %33 = arith.maximumf %31, %32 : vector<8x128xf32>
    %34 = arith.truncf %33 : vector<8x128xf32> to vector<8x128xbf16>
    %c0_24 = arith.constant 0 : index
    %c0_25 = arith.constant 0 : index
    %35 = vector.load %arg10[%c0_24, %c0_25] : memref<128x128xbf16, #tpu.memory_space<vmem>>, vector<128x128xbf16>
    %cst_26 = arith.constant dense<0.000000e+00> : vector<8x128xf32>
    %36 = tpu.matmul %34, %35, %cst_26 {dimension_numbers = #tpu.dot_dimension_numbers<[1], [0], [0], [1], [0, 0, 1, 1], [], []>} : vector<8x128xbf16>, vector<128x128xbf16>, vector<8x128xf32> -> vector<8x128xf32>
    %c0_27 = arith.constant 0 : index
    %c0_28 = arith.constant 0 : index
    %37 = vector.load %arg11[%c0_27, %c0_28] : memref<1x128xf32, #tpu.memory_space<vmem>>, vector<1x128xf32>
    %38 = vector.broadcast %37 : vector<1x128xf32> to vector<8x128xf32>
    %39 = arith.addf %36, %38 : vector<8x128xf32>
    %40 = arith.extf %26 : vector<8x128xbf16> to vector<8x128xf32>
    %41 = arith.addf %39, %40 : vector<8x128xf32>
    %cst_29 = arith.constant 0.000000e+00 : f32
    %42 = vector.broadcast %cst_29 : f32 to vector<8x128xf32>
    %43 = arith.maximumf %41, %42 : vector<8x128xf32>
    %44 = arith.truncf %43 : vector<8x128xf32> to vector<8x128xbf16>
    %c0_30 = arith.constant 0 : index
    %c0_31 = arith.constant 0 : index
    %45 = vector.load %arg12[%c0_30, %c0_31] : memref<128x128xbf16, #tpu.memory_space<vmem>>, vector<128x128xbf16>
    %cst_32 = arith.constant dense<0.000000e+00> : vector<8x128xf32>
    %46 = tpu.matmul %44, %45, %cst_32 {dimension_numbers = #tpu.dot_dimension_numbers<[1], [0], [0], [1], [0, 0, 1, 1], [], []>} : vector<8x128xbf16>, vector<128x128xbf16>, vector<8x128xf32> -> vector<8x128xf32>
    %c0_33 = arith.constant 0 : index
    %c0_34 = arith.constant 0 : index
    %47 = vector.load %arg13[%c0_33, %c0_34] : memref<1x128xf32, #tpu.memory_space<vmem>>, vector<1x128xf32>
    %48 = vector.broadcast %47 : vector<1x128xf32> to vector<8x128xf32>
    %49 = arith.addf %46, %48 : vector<8x128xf32>
    %50 = arith.truncf %49 : vector<8x128xf32> to vector<8x128xbf16>
    %c0_35 = arith.constant 0 : index
    %c0_36 = arith.constant 0 : index
    %51 = vector.load %arg14[%c0_35, %c0_36] : memref<8x128xbf16, #tpu.memory_space<vmem>>, vector<8x128xbf16>
    tpu.vector_store %arg14[%c0_35, %c0_36], %50 {strides = array<i32>} : memref<8x128xbf16, #tpu.memory_space<vmem>>, vector<8x128xbf16>,
    return
  }
  func.func @transform_0(%arg0: i32) -> (i32, i32) {
    %c0_i32 = arith.constant 0 : i32
    %c0_i32_0 = arith.constant 0 : i32
    return %arg0, %c0_i32 : i32, i32
  }
  func.func @transform_1(%arg0: i32) -> (i32, i32) {
    %c0_i32 = arith.constant 0 : i32
    %c0_i32_0 = arith.constant 0 : i32
    %c0_i32_1 = arith.constant 0 : i32
    return %c0_i32, %c0_i32_0 : i32, i32
  }
  func.func @transform_2(%arg0: i32) -> (i32, i32) {
    %c0_i32 = arith.constant 0 : i32
    %c0_i32_0 = arith.constant 0 : i32
    %c0_i32_1 = arith.constant 0 : i32
    return %c0_i32, %c0_i32_0 : i32, i32
  }
  func.func @transform_3(%arg0: i32) -> (i32, i32) {
    %c0_i32 = arith.constant 0 : i32
    %c0_i32_0 = arith.constant 0 : i32
    %c0_i32_1 = arith.constant 0 : i32
    return %c0_i32, %c0_i32_0 : i32, i32
  }
  func.func @transform_4(%arg0: i32) -> (i32, i32) {
    %c0_i32 = arith.constant 0 : i32
    %c0_i32_0 = arith.constant 0 : i32
    %c0_i32_1 = arith.constant 0 : i32
    return %c0_i32, %c0_i32_0 : i32, i32
  }
  func.func @transform_5(%arg0: i32) -> (i32, i32) {
    %c0_i32 = arith.constant 0 : i32
    %c0_i32_0 = arith.constant 0 : i32
    %c0_i32_1 = arith.constant 0 : i32
    return %c0_i32, %c0_i32_0 : i32, i32
  }
  func.func @transform_6(%arg0: i32) -> (i32, i32) {
    %c0_i32 = arith.constant 0 : i32
    %c0_i32_0 = arith.constant 0 : i32
    %c0_i32_1 = arith.constant 0 : i32
    return %c0_i32, %c0_i32_0 : i32, i32
  }
  func.func @transform_7(%arg0: i32) -> (i32, i32) {
    %c0_i32 = arith.constant 0 : i32
    %c0_i32_0 = arith.constant 0 : i32
    %c0_i32_1 = arith.constant 0 : i32
    return %c0_i32, %c0_i32_0 : i32, i32
  }
  func.func @transform_8(%arg0: i32) -> (i32, i32) {
    %c0_i32 = arith.constant 0 : i32
    %c0_i32_0 = arith.constant 0 : i32
    %c0_i32_1 = arith.constant 0 : i32
    return %c0_i32, %c0_i32_0 : i32, i32
  }
  func.func @transform_9(%arg0: i32) -> (i32, i32) {
    %c0_i32 = arith.constant 0 : i32
    %c0_i32_0 = arith.constant 0 : i32
    %c0_i32_1 = arith.constant 0 : i32
    return %c0_i32, %c0_i32_0 : i32, i32
  }
  func.func @transform_10(%arg0: i32) -> (i32, i32) {
    %c0_i32 = arith.constant 0 : i32
    %c0_i32_0 = arith.constant 0 : i32
    %c0_i32_1 = arith.constant 0 : i32
    return %c0_i32, %c0_i32_0 : i32, i32
  }
  func.func @transform_11(%arg0: i32) -> (i32, i32) {
    %c0_i32 = arith.constant 0 : i32
    %c0_i32_0 = arith.constant 0 : i32
    %c0_i32_1 = arith.constant 0 : i32
    return %c0_i32, %c0_i32_0 : i32, i32
  }
  func.func @transform_12(%arg0: i32) -> (i32, i32) {
    %c0_i32 = arith.constant 0 : i32
    %c0_i32_0 = arith.constant 0 : i32
    %c0_i32_1 = arith.constant 0 : i32
    return %c0_i32, %c0_i32_0 : i32, i32
  }
  func.func @transform_13(%arg0: i32) -> (i32, i32) {
    %c0_i32 = arith.constant 0 : i32
    %c0_i32_0 = arith.constant 0 : i32
    return %arg0, %c0_i32 : i32, i32
  }
}

module attributes {stable_mosaic.version = 11 : i64} {
  func.func @residual_mlp_kernel(%arg0: i32, %arg1: memref<8x128xbf16, #tpu.memory_space<vmem>>, %arg2: memref<128x128xbf16, #tpu.memory_space<vmem>>, %arg3: memref<1x128xf32, #tpu.memory_space<vmem>>, %arg4: memref<128x128xbf16, #tpu.memory_space<vmem>>, %arg5: memref<1x128xf32, #tpu.memory_space<vmem>>, %arg6: memref<128x128xbf16, #tpu.memory_space<vmem>>, %arg7: memref<1x128xf32, #tpu.memory_space<vmem>>, %arg8: memref<128x128xbf16, #tpu.memory_space<vmem>>, %arg9: memref<1x128xf32, #tpu.memory_space<vmem>>, %arg10: memref<128x128xbf16, #tpu.memory_space<vmem>>, %arg11: memref<1x128xf32, #tpu.memory_space<vmem>>, %arg12: memref<128x128xbf16, #tpu.memory_space<vmem>>, %arg13: memref<1x128xf32, #tpu.memory_space<vmem>>, %arg14: memref<8x128xbf16, #tpu.memory_space<vmem>>) attributes {dimension_semantics = [#tpu.dimension_semantics<parallel>], iteration_bounds = array<i64: 1>, scalar_prefetch = 0 : i64, scratch_operands = 0 : i64, tpu.core_type = #tpu.core_type<tc>, window_params = [{transform_indices = @transform_0, window_bounds = array<i64: 8, 128>}, {pipeline_mode = #tpu.pipeline_mode<synchronous>, transform_indices = @transform_1, window_bounds = array<i64: 128, 128>}, {pipeline_mode = #tpu.pipeline_mode<synchronous>, transform_indices = @transform_2, window_bounds = array<i64: 1, 128>}, {pipeline_mode = #tpu.pipeline_mode<synchronous>, transform_indices = @transform_3, window_bounds = array<i64: 128, 128>}, {pipeline_mode = #tpu.pipeline_mode<synchronous>, transform_indices = @transform_4, window_bounds = array<i64: 1, 128>}, {pipeline_mode = #tpu.pipeline_mode<synchronous>, transform_indices = @transform_5, window_bounds = array<i64: 128, 128>}, {pipeline_mode = #tpu.pipeline_mode<synchronous>, transform_indices = @transform_6, window_bounds = array<i64: 1, 128>}, {pipeline_mode = #tpu.pipeline_mode<synchronous>, transform_indices = @transform_7, window_bounds = array<i64: 128, 128>}, {pipeline_mode = #tpu.pipeline_mode<synchronous>, transform_indices = @transform_8, window_bounds = array<i64: 1, 128>}, {pipeline_mode = #tpu.pipeline_mode<synchronous>, transform_indices = @transform_9, window_bounds = array<i64: 128, 128>}, {pipeline_mode = #tpu.pipeline_mode<synchronous>, transform_indices = @transform_10, window_bounds = array<i64: 1, 128>}, {pipeline_mode = #tpu.pipeline_mode<synchronous>, transform_indices = @transform_11, window_bounds = array<i64: 128, 128>}, {pipeline_mode = #tpu.pipeline_mode<synchronous>, transform_indices = @transform_12, window_bounds = array<i64: 1, 128>}, {transform_indices = @transform_13, window_bounds = array<i64: 8, 128>}]} {
    %c0 = arith.constant 0 : index
    %c0_0 = arith.constant 0 : index
    %0 = vector.load %arg1[%c0, %c0_0] : memref<8x128xbf16, #tpu.memory_space<vmem>>, vector<8x128xbf16>
    %c0_1 = arith.constant 0 : index
    %c0_2 = arith.constant 0 : index
    %1 = vector.load %arg2[%c0_1, %c0_2] : memref<128x128xbf16, #tpu.memory_space<vmem>>, vector<128x128xbf16>
    %cst = arith.constant dense<0.000000e+00> : vector<8x128xf32>
    %2 = tpu.matmul %0, %1, %cst {dimension_numbers = #tpu.dot_dimension_numbers<[1], [0], [0], [1], [0, 0, 1, 1], [], []>} : vector<8x128xbf16>, vector<128x128xbf16>, vector<8x128xf32> -> vector<8x128xf32>
    %c0_3 = arith.constant 0 : index
    %c0_4 = arith.constant 0 : index
    %3 = vector.load %arg3[%c0_3, %c0_4] : memref<1x128xf32, #tpu.memory_space<vmem>>, vector<1x128xf32>
    %4 = vector.broadcast %3 : vector<1x128xf32> to vector<8x128xf32>
    %5 = arith.addf %2, %4 : vector<8x128xf32>
    %cst_5 = arith.constant 0.000000e+00 : f32
    %6 = vector.broadcast %cst_5 : f32 to vector<8x128xf32>
    %7 = arith.maximumf %5, %6 : vector<8x128xf32>
    %8 = arith.truncf %7 : vector<8x128xf32> to vector<8x128xbf16>
    %c0_6 = arith.constant 0 : index
    %c0_7 = arith.constant 0 : index
    %9 = vector.load %arg4[%c0_6, %c0_7] : memref<128x128xbf16, #tpu.memory_space<vmem>>, vector<128x128xbf16>
    %cst_8 = arith.constant dense<0.000000e+00> : vector<8x128xf32>
    %10 = tpu.matmul %8, %9, %cst_8 {dimension_numbers = #tpu.dot_dimension_numbers<[1], [0], [0], [1], [0, 0, 1, 1], [], []>} : vector<8x128xbf16>, vector<128x128xbf16>, vector<8x128xf32> -> vector<8x128xf32>
    %c0_9 = arith.constant 0 : index
    %c0_10 = arith.constant 0 : index
    %11 = vector.load %arg5[%c0_9, %c0_10] : memref<1x128xf32, #tpu.memory_space<vmem>>, vector<1x128xf32>
    %12 = vector.broadcast %11 : vector<1x128xf32> to vector<8x128xf32>
    %13 = arith.addf %10, %12 : vector<8x128xf32>
    %cst_11 = arith.constant 0.000000e+00 : f32
    %14 = vector.broadcast %cst_11 : f32 to vector<8x128xf32>
    %15 = arith.maximumf %13, %14 : vector<8x128xf32>
    %16 = arith.truncf %15 : vector<8x128xf32> to vector<8x128xbf16>
    %c0_12 = arith.constant 0 : index
    %c0_13 = arith.constant 0 : index
    %17 = vector.load %arg6[%c0_12, %c0_13] : memref<128x128xbf16, #tpu.memory_space<vmem>>, vector<128x128xbf16>
    %cst_14 = arith.constant dense<0.000000e+00> : vector<8x128xf32>
    %18 = tpu.matmul %16, %17, %cst_14 {dimension_numbers = #tpu.dot_dimension_numbers<[1], [0], [0], [1], [0, 0, 1, 1], [], []>} : vector<8x128xbf16>, vector<128x128xbf16>, vector<8x128xf32> -> vector<8x128xf32>
    %c0_15 = arith.constant 0 : index
    %c0_16 = arith.constant 0 : index
    %19 = vector.load %arg7[%c0_15, %c0_16] : memref<1x128xf32, #tpu.memory_space<vmem>>, vector<1x128xf32>
    %20 = vector.broadcast %19 : vector<1x128xf32> to vector<8x128xf32>
    %21 = arith.addf %18, %20 : vector<8x128xf32>
    %22 = arith.extf %8 : vector<8x128xbf16> to vector<8x128xf32>
    %23 = arith.addf %21, %22 : vector<8x128xf32>
    %cst_17 = arith.constant 0.000000e+00 : f32
    %24 = vector.broadcast %cst_17 : f32 to vector<8x128xf32>
    %25 = arith.maximumf %23, %24 : vector<8x128xf32>
    %26 = arith.truncf %25 : vector<8x128xf32> to vector<8x128xbf16>
    %c0_18 = arith.constant 0 : index
    %c0_19 = arith.constant 0 : index
    %27 = vector.load %arg8[%c0_18, %c0_19] : memref<128x128xbf16, #tpu.memory_space<vmem>>, vector<128x128xbf16>
    %cst_20 = arith.constant dense<0.000000e+00> : vector<8x128xf32>
    %28 = tpu.matmul %26, %27, %cst_20 {dimension_numbers = #tpu.dot_dimension_numbers<[1], [0], [0], [1], [0, 0, 1, 1], [], []>} : vector<8x128xbf16>, vector<128x128xbf16>, vector<8x128xf32> -> vector<8x128xf32>
    %c0_21 = arith.constant 0 : index
    %c0_22 = arith.constant 0 : index
    %29 = vector.load %arg9[%c0_21, %c0_22] : memref<1x128xf32, #tpu.memory_space<vmem>>, vector<1x128xf32>
    %30 = vector.broadcast %29 : vector<1x128xf32> to vector<8x128xf32>
    %31 = arith.addf %28, %30 : vector<8x128xf32>
    %cst_23 = arith.constant 0.000000e+00 : f32
    %32 = vector.broadcast %cst_23 : f32 to vector<8x128xf32>
    %33 = arith.maximumf %31, %32 : vector<8x128xf32>
    %34 = arith.truncf %33 : vector<8x128xf32> to vector<8x128xbf16>
    %c0_24 = arith.constant 0 : index
    %c0_25 = arith.constant 0 : index
    %35 = vector.load %arg10[%c0_24, %c0_25] : memref<128x128xbf16, #tpu.memory_space<vmem>>, vector<128x128xbf16>
    %cst_26 = arith.constant dense<0.000000e+00> : vector<8x128xf32>
    %36 = tpu.matmul %34, %35, %cst_26 {dimension_numbers = #tpu.dot_dimension_numbers<[1], [0], [0], [1], [0, 0, 1, 1], [], []>} : vector<8x128xbf16>, vector<128x128xbf16>, vector<8x128xf32> -> vector<8x128xf32>
    %c0_27 = arith.constant 0 : index
    %c0_28 = arith.constant 0 : index
    %37 = vector.load %arg11[%c0_27, %c0_28] : memref<1x128xf32, #tpu.memory_space<vmem>>, vector<1x128xf32>
    %38 = vector.broadcast %37 : vector<1x128xf32> to vector<8x128xf32>
    %39 = arith.addf %36, %38 : vector<8x128xf32>
    %40 = arith.extf %26 : vector<8x128xbf16> to vector<8x128xf32>
    %41 = arith.addf %39, %40 : vector<8x128xf32>
    %cst_29 = arith.constant 0.000000e+00 : f32
    %42 = vector.broadcast %cst_29 : f32 to vector<8x128xf32>
    %43 = arith.maximumf %41, %42 : vector<8x128xf32>
    %44 = arith.truncf %43 : vector<8x128xf32> to vector<8x128xbf16>
    %c0_30 = arith.constant 0 : index
    %c0_31 = arith.constant 0 : index
    %45 = vector.load %arg12[%c0_30, %c0_31] : memref<128x128xbf16, #tpu.memory_space<vmem>>, vector<128x128xbf16>
    %cst_32 = arith.constant dense<0.000000e+00> : vector<8x128xf32>
    %46 = tpu.matmul %44, %45, %cst_32 {dimension_numbers = #tpu.dot_dimension_numbers<[1], [0], [0], [1], [0, 0, 1, 1], [], []>} : vector<8x128xbf16>, vector<128x128xbf16>, vector<8x128xf32> -> vector<8x128xf32>
    %c0_33 = arith.constant 0 : index
    %c0_34 = arith.constant 0 : index
    %47 = vector.load %arg13[%c0_33, %c0_34] : memref<1x128xf32, #tpu.memory_space<vmem>>, vector<1x128xf32>
    %48 = vector.broadcast %47 : vector<1x128xf32> to vector<8x128xf32>
    %49 = arith.addf %46, %48 : vector<8x128xf32>
    %50 = arith.truncf %49 : vector<8x128xf32> to vector<8x128xbf16>
    %c0_35 = arith.constant 0 : index
    %c0_36 = arith.constant 0 : index
    %51 = vector.load %arg14[%c0_35, %c0_36] : memref<8x128xbf16, #tpu.memory_space<vmem>>, vector<8x128xbf16>
    tpu.vector_store %arg14[%c0_35, %c0_36], %50 {strides = array<i32>} : memref<8x128xbf16, #tpu.memory_space<vmem>>, vector<8x128xbf16>,
    return
  }
  func.func @transform_0(%arg0: i32) -> (i32, i32) {
    %c0_i32 = arith.constant 0 : i32
    %c0_i32_0 = arith.constant 0 : i32
    return %arg0, %c0_i32 : i32, i32
  }
  func.func @transform_1(%arg0: i32) -> (i32, i32) {
    %c0_i32 = arith.constant 0 : i32
    %c0_i32_0 = arith.constant 0 : i32
    %c0_i32_1 = arith.constant 0 : i32
    return %c0_i32, %c0_i32_0 : i32, i32
  }
  func.func @transform_2(%arg0: i32) -> (i32, i32) {
    %c0_i32 = arith.constant 0 : i32
    %c0_i32_0 = arith.constant 0 : i32
    %c0_i32_1 = arith.constant 0 : i32
    return %c0_i32, %c0_i32_0 : i32, i32
  }
  func.func @transform_3(%arg0: i32) -> (i32, i32) {
    %c0_i32 = arith.constant 0 : i32
    %c0_i32_0 = arith.constant 0 : i32
    %c0_i32_1 = arith.constant 0 : i32
    return %c0_i32, %c0_i32_0 : i32, i32
  }
  func.func @transform_4(%arg0: i32) -> (i32, i32) {
    %c0_i32 = arith.constant 0 : i32
    %c0_i32_0 = arith.constant 0 : i32
    %c0_i32_1 = arith.constant 0 : i32
    return %c0_i32, %c0_i32_0 : i32, i32
  }
  func.func @transform_5(%arg0: i32) -> (i32, i32) {
    %c0_i32 = arith.constant 0 : i32
    %c0_i32_0 = arith.constant 0 : i32
    %c0_i32_1 = arith.constant 0 : i32
    return %c0_i32, %c0_i32_0 : i32, i32
  }
  func.func @transform_6(%arg0: i32) -> (i32, i32) {
    %c0_i32 = arith.constant 0 : i32
    %c0_i32_0 = arith.constant 0 : i32
    %c0_i32_1 = arith.constant 0 : i32
    return %c0_i32, %c0_i32_0 : i32, i32
  }
  func.func @transform_7(%arg0: i32) -> (i32, i32) {
    %c0_i32 = arith.constant 0 : i32
    %c0_i32_0 = arith.constant 0 : i32
    %c0_i32_1 = arith.constant 0 : i32
    return %c0_i32, %c0_i32_0 : i32, i32
  }
  func.func @transform_8(%arg0: i32) -> (i32, i32) {
    %c0_i32 = arith.constant 0 : i32
    %c0_i32_0 = arith.constant 0 : i32
    %c0_i32_1 = arith.constant 0 : i32
    return %c0_i32, %c0_i32_0 : i32, i32
  }
  func.func @transform_9(%arg0: i32) -> (i32, i32) {
    %c0_i32 = arith.constant 0 : i32
    %c0_i32_0 = arith.constant 0 : i32
    %c0_i32_1 = arith.constant 0 : i32
    return %c0_i32, %c0_i32_0 : i32, i32
  }
  func.func @transform_10(%arg0: i32) -> (i32, i32) {
    %c0_i32 = arith.constant 0 : i32
    %c0_i32_0 = arith.constant 0 : i32
    %c0_i32_1 = arith.constant 0 : i32
    return %c0_i32, %c0_i32_0 : i32, i32
  }
  func.func @transform_11(%arg0: i32) -> (i32, i32) {
    %c0_i32 = arith.constant 0 : i32
    %c0_i32_0 = arith.constant 0 : i32
    %c0_i32_1 = arith.constant 0 : i32
    return %c0_i32, %c0_i32_0 : i32, i32
  }
  func.func @transform_12(%arg0: i32) -> (i32, i32) {
    %c0_i32 = arith.constant 0 : i32
    %c0_i32_0 = arith.constant 0 : i32
    %c0_i32_1 = arith.constant 0 : i32
    return %c0_i32, %c0_i32_0 : i32, i32
  }
  func.func @transform_13(%arg0: i32) -> (i32, i32) {
    %c0_i32 = arith.constant 0 : i32
    %c0_i32_0 = arith.constant 0 : i32
    return %arg0, %c0_i32 : i32, i32
  }
}

</mosaic_0001>

<llo_original>
// kernel: tpu_custom_call.1
$region0: #{tpu_custom_call.1}
  #allocation0 [shape = 'u32[]', space=smem, size = 0x4, offset = 0x4, fixed_abs, tag = 'smem constant byte address 0x4 - core index']
  #allocation1 [shape = 'u32[144,128]{1,0:T(1,128)}', space=vmem, size = 0x12000, scoped, tag = 'internal scratch']
  %s0 = inlined_call_operand.hbm [shape: bf16[8,128], index: 0, kind: input, shape index: {}]
  %s1 = inlined_call_operand.hbm [shape: bf16[128,128], index: 1, kind: input, shape index: {}]
  %s2 = inlined_call_operand.vmem [shape: f32[1,128], index: 2, kind: input, shape index: {}]
  %s3 = inlined_call_operand.hbm [shape: bf16[128,128], index: 3, kind: input, shape index: {}]
  %s4 = inlined_call_operand.vmem [shape: f32[1,128], index: 4, kind: input, shape index: {}]
  %s5 = inlined_call_operand.hbm [shape: bf16[128,128], index: 5, kind: input, shape index: {}]
  %s6 = inlined_call_operand.vmem [shape: f32[1,128], index: 6, kind: input, shape index: {}]
  %s7 = inlined_call_operand.hbm [shape: bf16[128,128], index: 7, kind: input, shape index: {}]
  %s8 = inlined_call_operand.vmem [shape: f32[1,128], index: 8, kind: input, shape index: {}]
  %s9 = inlined_call_operand.hbm [shape: bf16[128,128], index: 9, kind: input, shape index: {}]
  %s10 = inlined_call_operand.vmem [shape: f32[1,128], index: 10, kind: input, shape index: {}]
  %s11 = inlined_call_operand.hbm [shape: bf16[128,128], index: 11, kind: input, shape index: {}]
  %s12 = inlined_call_operand.vmem [shape: f32[1,128], index: 12, kind: input, shape index: {}]
  %s13 = inlined_call_operand.hbm [shape: bf16[8,128], index: 13, kind: output, shape index: {}]
  %s14 = sld [smem:[#allocation0]]
  $region90: #{tpu_custom_call.1} parent=0
    _
  %s16 = ssub.s32 1, %s14
  %s17 = scalar_select 0, %s16, %s14
  $region1: #{tpu_custom_call.1} parent=0
    #allocation2 [shape = 'u8[2048]{0}', space=vmem, size = 0x800, scoped, tag = 'input window, operand 0, single buffered']
    #allocation3 [shape = 's32[1]{0}', space=sflag, size = 0x4, scoped, tag = 'scoped memory for tpu_custom_call.1']
    #allocation4 [shape = 's32[1]{0}', space=sflag, size = 0x4, scoped, tag = 'scoped memory for tpu_custom_call.1']
    #allocation5 [shape = 'u8[32768]{0}', space=vmem, size = 0x8000, scoped, tag = 'input window, operand 1, single buffered']
    #allocation6 [shape = 's32[1]{0}', space=sflag, size = 0x4, scoped, tag = 'scoped memory for tpu_custom_call.1']
    #allocation7 [shape = 'u8[32768]{0}', space=vmem, size = 0x8000, scoped, tag = 'input window, operand 3, single buffered']
    #allocation8 [shape = 'u8[32768]{0}', space=vmem, size = 0x8000, scoped, tag = 'input window, operand 5, single buffered']
    #allocation9 [shape = 's32[1]{0}', space=sflag, size = 0x4, scoped, tag = 'scoped memory for tpu_custom_call.1']
    #allocation10 [shape = 'u8[32768]{0}', space=vmem, size = 0x8000, scoped, tag = 'input window, operand 7, single buffered']
    #allocation11 [shape = 'u8[32768]{0}', space=vmem, size = 0x8000, scoped, tag = 'input window, operand 9, single buffered']
    #allocation12 [shape = 's32[1]{0}', space=sflag, size = 0x4, scoped, tag = 'scoped memory for tpu_custom_call.1']
    #allocation13 [shape = 'u8[32768]{0}', space=vmem, size = 0x8000, scoped, tag = 'input window, operand 11, single buffered']
    #allocation14 [shape = 'u8[2048]{0}', space=vmem, size = 0x800, scoped, tag = 'output window, operand 0, single buffered']
    %18 = vsyncpa [#allocation3], 0
    %19 = vsyncpa [#allocation6], 0
    %20 = vsyncpa [#allocation9], 0
    %21 = vsyncpa [#allocation12], 0
    %22 = vsyncpa [#allocation4], 0
    // Predicated region
    $region2: #{tpu_custom_call.1} parent=1 // pred_check
      _
    $region3: #{tpu_custom_call.1} parent=1 // pred_check_branch
      %24 = sbr.rel (0) target = $region5
    $region4: #{tpu_custom_call.1} parent=1 // pred_region
      %s26 = ssub.s32 64, 64
      %27 = vsyncadd [#allocation3], %s26
      %s29 = sshll.u32 [#allocation2], 4
      %s30 = int_to_ptr.vmem [resolvable:$true] %s29
      %32 = dma.hbm_to_vmem [thread:$0]  %s0, 64, %s30, [#allocation3]
    $region5: #{tpu_custom_call.1} parent=1 // pred_fallthru
      _
    // Predicated region
    $region6: #{tpu_custom_call.1} parent=1 // pred_check
      _
    $region7: #{tpu_custom_call.1} parent=1 // pred_check_branch
      %34 = sbr.rel (0) target = $region9
    $region8: #{tpu_custom_call.1} parent=1 // pred_region
      %s36 = ssub.s32 1024, 1024
      %37 = vsyncadd [#allocation6], %s36
      %s38 = sshll.u32 [#allocation5], 4
      %s39 = int_to_ptr.vmem [resolvable:$true] %s38
      %44 = dma.hbm_to_vmem [thread:$0]  %s1, 1024, %s39, [#allocation6], 64, 64, 4
    $region9: #{tpu_custom_call.1} parent=1 // pred_fallthru
      _
    // Predicated region
    $region10: #{tpu_custom_call.1} parent=1 // pred_check
      _
    $region11: #{tpu_custom_call.1} parent=1 // pred_check_branch
      %46 = sbr.rel (0) target = $region13
    $region12: #{tpu_custom_call.1} parent=1 // pred_region
      _
    $region13: #{tpu_custom_call.1} parent=1 // pred_fallthru
      _
    // Predicated region
    $region14: #{tpu_custom_call.1} parent=1 // pred_check
      _
    $region15: #{tpu_custom_call.1} parent=1 // pred_check_branch
      %48 = sbr.rel (0) target = $region17
    $region16: #{tpu_custom_call.1} parent=1 // pred_region
      %s50 = ssub.s32 1024, 1024
      %51 = vsyncadd [#allocation6], %s50
      %s52 = sshll.u32 [#allocation7], 4
      %s53 = int_to_ptr.vmem [resolvable:$true] %s52
      %58 = dma.hbm_to_vmem [thread:$0]  %s3, 1024, %s53, [#allocation6], 64, 64, 4
    $region17: #{tpu_custom_call.1} parent=1 // pred_fallthru
      _
    // Predicated region
    $region18: #{tpu_custom_call.1} parent=1 // pred_check
      _
    $region19: #{tpu_custom_call.1} parent=1 // pred_check_branch
      %60 = sbr.rel (0) target = $region21
    $region20: #{tpu_custom_call.1} parent=1 // pred_region
      _
    $region21: #{tpu_custom_call.1} parent=1 // pred_fallthru
      _
    // Predicated region
    $region22: #{tpu_custom_call.1} parent=1 // pred_check
      _
    $region23: #{tpu_custom_call.1} parent=1 // pred_check_branch
      %62 = sbr.rel (0) target = $region25
    $region24: #{tpu_custom_call.1} parent=1 // pred_region
      %s64 = ssub.s32 1024, 1024
      %65 = vsyncadd [#allocation9], %s64
      %s66 = sshll.u32 [#allocation8], 4
      %s67 = int_to_ptr.vmem [resolvable:$true] %s66
      %72 = dma.hbm_to_vmem [thread:$0]  %s5, 1024, %s67, [#allocation9], 64, 64, 4
    $region25: #{tpu_custom_call.1} parent=1 // pred_fallthru
      _
    // Predicated region
    $region26: #{tpu_custom_call.1} parent=1 // pred_check
      _
    $region27: #{tpu_custom_call.1} parent=1 // pred_check_branch
      %74 = sbr.rel (0) target = $region29
    $region28: #{tpu_custom_call.1} parent=1 // pred_region
      _
    $region29: #{tpu_custom_call.1} parent=1 // pred_fallthru
      _
    // Predicated region
    $region30: #{tpu_custom_call.1} parent=1 // pred_check
      _
    $region31: #{tpu_custom_call.1} parent=1 // pred_check_branch
      %76 = sbr.rel (0) target = $region33
    $region32: #{tpu_custom_call.1} parent=1 // pred_region
      %s78 = ssub.s32 1024, 1024
      %79 = vsyncadd [#allocation9], %s78
      %s80 = sshll.u32 [#allocation10], 4
      %s81 = int_to_ptr.vmem [resolvable:$true] %s80
      %86 = dma.hbm_to_vmem [thread:$0]  %s7, 1024, %s81, [#allocation9], 64, 64, 4
    $region33: #{tpu_custom_call.1} parent=1 // pred_fallthru
      _
    // Predicated region
    $region34: #{tpu_custom_call.1} parent=1 // pred_check
      _
    $region35: #{tpu_custom_call.1} parent=1 // pred_check_branch
      %88 = sbr.rel (0) target = $region37
    $region36: #{tpu_custom_call.1} parent=1 // pred_region
      _
    $region37: #{tpu_custom_call.1} parent=1 // pred_fallthru
      _
    // Predicated region
    $region38: #{tpu_custom_call.1} parent=1 // pred_check
      _
    $region39: #{tpu_custom_call.1} parent=1 // pred_check_branch
      %90 = sbr.rel (0) target = $region41
    $region40: #{tpu_custom_call.1} parent=1 // pred_region
      %s92 = ssub.s32 1024, 1024
      %93 = vsyncadd [#allocation12], %s92
      %s94 = sshll.u32 [#allocation11], 4
      %s95 = int_to_ptr.vmem [resolvable:$true] %s94
      %100 = dma.hbm_to_vmem [thread:$0]  %s9, 1024, %s95, [#allocation12], 64, 64, 4
    $region41: #{tpu_custom_call.1} parent=1 // pred_fallthru
      _
    // Predicated region
    $region42: #{tpu_custom_call.1} parent=1 // pred_check
      _
    $region43: #{tpu_custom_call.1} parent=1 // pred_check_branch
      %102 = sbr.rel (0) target = $region45
    $region44: #{tpu_custom_call.1} parent=1 // pred_region
      _
    $region45: #{tpu_custom_call.1} parent=1 // pred_fallthru
      _
    // Predicated region
    $region46: #{tpu_custom_call.1} parent=1 // pred_check
      _
    $region47: #{tpu_custom_call.1} parent=1 // pred_check_branch
      %104 = sbr.rel (0) target = $region49
    $region48: #{tpu_custom_call.1} parent=1 // pred_region
      %s106 = ssub.s32 1024, 1024
      %107 = vsyncadd [#allocation12], %s106
      %s108 = sshll.u32 [#allocation13], 4
      %s109 = int_to_ptr.vmem [resolvable:$true] %s108
      %114 = dma.hbm_to_vmem [thread:$0]  %s11, 1024, %s109, [#allocation12], 64, 64, 4
    $region49: #{tpu_custom_call.1} parent=1 // pred_fallthru
      _
    // Predicated region
    $region50: #{tpu_custom_call.1} parent=1 // pred_check
      _
    $region51: #{tpu_custom_call.1} parent=1 // pred_check_branch
      %116 = sbr.rel (0) target = $region53
    $region52: #{tpu_custom_call.1} parent=1 // pred_region
      _
    $region53: #{tpu_custom_call.1} parent=1 // pred_fallthru
      _
    // Predicated region
    $region54: #{tpu_custom_call.1} parent=1 // pred_check
      _
    $region55: #{tpu_custom_call.1} parent=1 // pred_check_branch
      %118 = sbr.rel (0) target = $region57
    $region56: #{tpu_custom_call.1} parent=1 // pred_region
      %119 = dma.done [#allocation3], 64
    $region57: #{tpu_custom_call.1} parent=1 // pred_fallthru
      _
    // Predicated region
    $region58: #{tpu_custom_call.1} parent=1 // pred_check
      _
    $region59: #{tpu_custom_call.1} parent=1 // pred_check_branch
      %121 = sbr.rel (0) target = $region61
    $region60: #{tpu_custom_call.1} parent=1 // pred_region
      %122 = dma.done [#allocation6], 1024
    $region61: #{tpu_custom_call.1} parent=1 // pred_fallthru
      _
    // Predicated region
    $region62: #{tpu_custom_call.1} parent=1 // pred_check
      _
    $region63: #{tpu_custom_call.1} parent=1 // pred_check_branch
      %124 = sbr.rel (0) target = $region65
    $region64: #{tpu_custom_call.1} parent=1 // pred_region
      %125 = dma.done [#allocation6], 1024
    $region65: #{tpu_custom_call.1} parent=1 // pred_fallthru
      _
    // Predicated region
    $region66: #{tpu_custom_call.1} parent=1 // pred_check
      _
    $region67: #{tpu_custom_call.1} parent=1 // pred_check_branch
      %127 = sbr.rel (0) target = $region69
    $region68: #{tpu_custom_call.1} parent=1 // pred_region
      %128 = dma.done [#allocation9], 1024
    $region69: #{tpu_custom_call.1} parent=1 // pred_fallthru
      _
    // Predicated region
    $region70: #{tpu_custom_call.1} parent=1 // pred_check
      _
    $region71: #{tpu_custom_call.1} parent=1 // pred_check_branch
      %130 = sbr.rel (0) target = $region73
    $region72: #{tpu_custom_call.1} parent=1 // pred_region
      %131 = dma.done [#allocation9], 1024
    $region73: #{tpu_custom_call.1} parent=1 // pred_fallthru
      _
    // Predicated region
    $region74: #{tpu_custom_call.1} parent=1 // pred_check
      _
    $region75: #{tpu_custom_call.1} parent=1 // pred_check_branch
      %133 = sbr.rel (0) target = $region77
    $region76: #{tpu_custom_call.1} parent=1 // pred_region
      %134 = dma.done [#allocation12], 1024
    $region77: #{tpu_custom_call.1} parent=1 // pred_fallthru
      _
    // Predicated region
    $region78: #{tpu_custom_call.1} parent=1 // pred_check
      _
    $region79: #{tpu_custom_call.1} parent=1 // pred_check_branch
      %136 = sbr.rel (0) target = $region81
    $region80: #{tpu_custom_call.1} parent=1 // pred_region
      %137 = dma.done [#allocation12], 1024
    $region81: #{tpu_custom_call.1} parent=1 // pred_fallthru
      _
    %v139 = vld [vmem:[#allocation2] sm:$0xf]
    %v140 = vld [vmem:[#allocation5] sm:$0xf]
    %v141 = vld [vmem:[#allocation5 + $0x4] sm:$0xf]
    %v142 = vld [vmem:[#allocation5 + $0x8] sm:$0xf]
    %v143 = vld [vmem:[#allocation5 + $0xc] sm:$0xf]
    %v144 = vld [vmem:[#allocation5 + $0x10] sm:$0xf]
    %v145 = vld [vmem:[#allocation5 + $0x14] sm:$0xf]
    %v146 = vld [vmem:[#allocation5 + $0x18] sm:$0xf]
    %v147 = vld [vmem:[#allocation5 + $0x1c] sm:$0xf]
    %v148 = vld [vmem:[#allocation5 + $0x20] sm:$0xf]
    %v149 = vld [vmem:[#allocation5 + $0x24] sm:$0xf]
    %v150 = vld [vmem:[#allocation5 + $0x28] sm:$0xf]
    %v151 = vld [vmem:[#allocation5 + $0x2c] sm:$0xf]
    %v152 = vld [vmem:[#allocation5 + $0x30] sm:$0xf]
    %v153 = vld [vmem:[#allocation5 + $0x34] sm:$0xf]
    %v154 = vld [vmem:[#allocation5 + $0x38] sm:$0xf]
    %v155 = vld [vmem:[#allocation5 + $0x3c] sm:$0xf]
    %v156 = vld [vmem:[%s2] sm:$0x1]
    %v158 = vlaneseq
    %v159 = vshrl.u32 %v158, 7
    %v160 = vsub.s32 0, %v159
    %v161 = vrot.slane %v156, %v160
    %v179 = vunpack.c.l.b16 %v140
    %v180 = vunpack.c.l.b16 %v141
    %v181 = vunpack.c.l.b16 %v142
    %v182 = vunpack.c.l.b16 %v143
    %v183 = vunpack.c.l.b16 %v144
    %v184 = vunpack.c.l.b16 %v145
    %v185 = vunpack.c.l.b16 %v146
    %v186 = vunpack.c.l.b16 %v147
    %v187 = vunpack.c.l.b16 %v148
    %v188 = vunpack.c.l.b16 %v149
    %v189 = vunpack.c.l.b16 %v150
    %v190 = vunpack.c.l.b16 %v151
    %v191 = vunpack.c.l.b16 %v152
    %v192 = vunpack.c.l.b16 %v153
    %v193 = vunpack.c.l.b16 %v154
    %v194 = vunpack.c.l.b16 %v155
    %v195 = vpack.c.b16 %v180, %v179
    %v196 = vpack.c.b16 %v182, %v181
    %v197 = vpack.c.b16 %v184, %v183
    %v198 = vpack.c.b16 %v186, %v185
    %v199 = vpack.c.b16 %v188, %v187
    %v200 = vpack.c.b16 %v190, %v189
    %v201 = vpack.c.b16 %v192, %v191
    %v202 = vpack.c.b16 %v194, %v193
    %211 = vmatprep.subr.bf16.mxu0 0
    %212 = vmatpush1.bf16.msra.mxu0 %v195
    %213 = vmatprep.subr.bf16.mxu0 0
    %214 = vmatpush1.bf16.msra.mxu0 %v196
    %215 = vmatprep.subr.bf16.mxu0 0
    %216 = vmatpush1.bf16.msra.mxu0 %v197
    %217 = vmatprep.subr.bf16.mxu0 0
    %218 = vmatpush1.bf16.msra.mxu0 %v198
    %219 = vmatprep.subr.bf16.mxu0 0
    %220 = vmatpush1.bf16.msra.mxu0 %v199
    %221 = vmatprep.subr.bf16.mxu0 0
    %222 = vmatpush1.bf16.msra.mxu0 %v200
    %223 = vmatprep.subr.bf16.mxu0 0
    %224 = vmatpush1.bf16.msra.mxu0 %v201
    %225 = vmatprep.subr.bf16.mxu0 0
    %226 = vmatpush1.bf16.msra.mxu0 %v202
    %227 = vmatprep.subr.bf16.mxu0 0
    %228 = vmatpush1.bf16.msra.mxu0 0
    %229 = vmatprep.subr.bf16.mxu0 0
    %230 = vmatpush1.bf16.msra.mxu0 0
    %231 = vmatprep.subr.bf16.mxu0 0
    %232 = vmatpush1.bf16.msra.mxu0 0
    %233 = vmatprep.subr.bf16.mxu0 0
    %234 = vmatpush1.bf16.msra.mxu0 0
    %235 = vmatprep.subr.bf16.mxu0 0
    %236 = vmatpush1.bf16.msra.mxu0 0
    %237 = vmatprep.subr.bf16.mxu0 0
    %238 = vmatpush1.bf16.msra.mxu0 0
    %239 = vmatprep.subr.bf16.mxu0 0
    %240 = vmatpush1.bf16.msra.mxu0 0
    %241 = vmatprep.subr.bf16.mxu0 0
    %242 = vmatpush1.bf16.msra.mxu0 0
    %243 = vmatprep.mubr.bf16.mxu0 0
    %244 = vmatmul.mubr.bf16.gmra.mrb[0].mxu0 %v139
    %v245 = vpop.f32.mrb[0].mxu0
    %v246 = vadd.f32 %v161, %v245
    %v247 = vpop.f32.mrb[0].mxu0
    %v248 = vpop.f32.mrb[0].mxu0
    %v249 = vpop.f32.mrb[0].mxu0
    %250 = vdwg.mxu0
    %v251 = vmax.f32 %v246, 0.0
    %v252 = vpack.c.bf16 %v251, %v251
    %v253 = vld [vmem:[#allocation7] sm:$0xf]
    %v254 = vld [vmem:[#allocation7 + $0x4] sm:$0xf]
    %v255 = vld [vmem:[#allocation7 + $0x8] sm:$0xf]
    %v256 = vld [vmem:[#allocation7 + $0xc] sm:$0xf]
    %v257 = vld [vmem:[#allocation7 + $0x10] sm:$0xf]
    %v258 = vld [vmem:[#allocation7 + $0x14] sm:$0xf]
    %v259 = vld [vmem:[#allocation7 + $0x18] sm:$0xf]
    %v260 = vld [vmem:[#allocation7 + $0x1c] sm:$0xf]
    %v261 = vld [vmem:[#allocation7 + $0x20] sm:$0xf]
    %v262 = vld [vmem:[#allocation7 + $0x24] sm:$0xf]
    %v263 = vld [vmem:[#allocation7 + $0x28] sm:$0xf]
    %v264 = vld [vmem:[#allocation7 + $0x2c] sm:$0xf]
    %v265 = vld [vmem:[#allocation7 + $0x30] sm:$0xf]
    %v266 = vld [vmem:[#allocation7 + $0x34] sm:$0xf]
    %v267 = vld [vmem:[#allocation7 + $0x38] sm:$0xf]
    %v268 = vld [vmem:[#allocation7 + $0x3c] sm:$0xf]
    %v269 = vld [vmem:[%s4] sm:$0x1]
    %v271 = vlaneseq
    %v272 = vshrl.u32 %v271, 7
    %v273 = vsub.s32 0, %v272
    %v274 = vrot.slane %v269, %v273
    %v292 = vunpack.c.l.b16 %v253
    %v293 = vunpack.c.l.b16 %v254
    %v294 = vunpack.c.l.b16 %v255
    %v295 = vunpack.c.l.b16 %v256
    %v296 = vunpack.c.l.b16 %v257
    %v297 = vunpack.c.l.b16 %v258
    %v298 = vunpack.c.l.b16 %v259
    %v299 = vunpack.c.l.b16 %v260
    %v300 = vunpack.c.l.b16 %v261
    %v301 = vunpack.c.l.b16 %v262
    %v302 = vunpack.c.l.b16 %v263
    %v303 = vunpack.c.l.b16 %v264
    %v304 = vunpack.c.l.b16 %v265
    %v305 = vunpack.c.l.b16 %v266
    %v306 = vunpack.c.l.b16 %v267
    %v307 = vunpack.c.l.b16 %v268
    %v308 = vpack.c.b16 %v293, %v292
    %v309 = vpack.c.b16 %v295, %v294
    %v310 = vpack.c.b16 %v297, %v296
    %v311 = vpack.c.b16 %v299, %v298
    %v312 = vpack.c.b16 %v301, %v300
    %v313 = vpack.c.b16 %v303, %v302
    %v314 = vpack.c.b16 %v305, %v304
    %v315 = vpack.c.b16 %v307, %v306
    %324 = vmatprep.subr.bf16.mxu0 0
    %325 = vmatpush1.bf16.msra.mxu0 %v308
    %326 = vmatprep.subr.bf16.mxu0 0
    %327 = vmatpush1.bf16.msra.mxu0 %v309
    %328 = vmatprep.subr.bf16.mxu0 0
    %329 = vmatpush1.bf16.msra.mxu0 %v310
    %330 = vmatprep.subr.bf16.mxu0 0
    %331 = vmatpush1.bf16.msra.mxu0 %v311
    %332 = vmatprep.subr.bf16.mxu0 0
    %333 = vmatpush1.bf16.msra.mxu0 %v312
    %334 = vmatprep.subr.bf16.mxu0 0
    %335 = vmatpush1.bf16.msra.mxu0 %v313
    %336 = vmatprep.subr.bf16.mxu0 0
    %337 = vmatpush1.bf16.msra.mxu0 %v314
    %338 = vmatprep.subr.bf16.mxu0 0
    %339 = vmatpush1.bf16.msra.mxu0 %v315
    %340 = vmatprep.subr.bf16.mxu0 0
    %341 = vmatpush1.bf16.msra.mxu0 0
    %342 = vmatprep.subr.bf16.mxu0 0
    %343 = vmatpush1.bf16.msra.mxu0 0
    %344 = vmatprep.subr.bf16.mxu0 0
    %345 = vmatpush1.bf16.msra.mxu0 0
    %346 = vmatprep.subr.bf16.mxu0 0
    %347 = vmatpush1.bf16.msra.mxu0 0
    %348 = vmatprep.subr.bf16.mxu0 0
    %349 = vmatpush1.bf16.msra.mxu0 0
    %350 = vmatprep.subr.bf16.mxu0 0
    %351 = vmatpush1.bf16.msra.mxu0 0
    %352 = vmatprep.subr.bf16.mxu0 0
    %353 = vmatpush1.bf16.msra.mxu0 0
    %354 = vmatprep.subr.bf16.mxu0 0
    %355 = vmatpush1.bf16.msra.mxu0 0
    %356 = vmatprep.mubr.bf16.mxu0 0
    %357 = vmatmul.mubr.bf16.gmra.mrb[0].mxu0 %v252
    %v358 = vpop.f32.mrb[0].mxu0
    %v359 = vadd.f32 %v274, %v358
    %v360 = vpop.f32.mrb[0].mxu0
    %v361 = vpop.f32.mrb[0].mxu0
    %v362 = vpop.f32.mrb[0].mxu0
    %363 = vdwg.mxu0
    %v364 = vmax.f32 %v359, 0.0
    %v365 = vpack.c.bf16 %v364, %v364
    %v366 = vld [vmem:[#allocation8] sm:$0xf]
    %v367 = vld [vmem:[#allocation8 + $0x4] sm:$0xf]
    %v368 = vld [vmem:[#allocation8 + $0x8] sm:$0xf]
    %v369 = vld [vmem:[#allocation8 + $0xc] sm:$0xf]
    %v370 = vld [vmem:[#allocation8 + $0x10] sm:$0xf]
    %v371 = vld [vmem:[#allocation8 + $0x14] sm:$0xf]
    %v372 = vld [vmem:[#allocation8 + $0x18] sm:$0xf]
    %v373 = vld [vmem:[#allocation8 + $0x1c] sm:$0xf]
    %v374 = vld [vmem:[#allocation8 + $0x20] sm:$0xf]
    %v375 = vld [vmem:[#allocation8 + $0x24] sm:$0xf]
    %v376 = vld [vmem:[#allocation8 + $0x28] sm:$0xf]
    %v377 = vld [vmem:[#allocation8 + $0x2c] sm:$0xf]
    %v378 = vld [vmem:[#allocation8 + $0x30] sm:$0xf]
    %v379 = vld [vmem:[#allocation8 + $0x34] sm:$0xf]
    %v380 = vld [vmem:[#allocation8 + $0x38] sm:$0xf]
    %v381 = vld [vmem:[#allocation8 + $0x3c] sm:$0xf]
    %v382 = vld [vmem:[%s6] sm:$0x1]
    %v384 = vlaneseq
    %v385 = vshrl.u32 %v384, 7
    %v386 = vsub.s32 0, %v385
    %v387 = vrot.slane %v382, %v386
    %v405 = vunpack.c.l.b16 %v366
    %v406 = vunpack.c.l.b16 %v367
    %v407 = vunpack.c.l.b16 %v368
    %v408 = vunpack.c.l.b16 %v369
    %v409 = vunpack.c.l.b16 %v370
    %v410 = vunpack.c.l.b16 %v371
    %v411 = vunpack.c.l.b16 %v372
    %v412 = vunpack.c.l.b16 %v373
    %v413 = vunpack.c.l.b16 %v374
    %v414 = vunpack.c.l.b16 %v375
    %v415 = vunpack.c.l.b16 %v376
    %v416 = vunpack.c.l.b16 %v377
    %v417 = vunpack.c.l.b16 %v378
    %v418 = vunpack.c.l.b16 %v379
    %v419 = vunpack.c.l.b16 %v380
    %v420 = vunpack.c.l.b16 %v381
    %v421 = vpack.c.b16 %v406, %v405
    %v422 = vpack.c.b16 %v408, %v407
    %v423 = vpack.c.b16 %v410, %v409
    %v424 = vpack.c.b16 %v412, %v411
    %v425 = vpack.c.b16 %v414, %v413
    %v426 = vpack.c.b16 %v416, %v415
    %v427 = vpack.c.b16 %v418, %v417
    %v428 = vpack.c.b16 %v420, %v419
    %437 = vmatprep.subr.bf16.mxu0 0
    %438 = vmatpush1.bf16.msra.mxu0 %v421
    %439 = vmatprep.subr.bf16.mxu0 0
    %440 = vmatpush1.bf16.msra.mxu0 %v422
    %441 = vmatprep.subr.bf16.mxu0 0
    %442 = vmatpush1.bf16.msra.mxu0 %v423
    %443 = vmatprep.subr.bf16.mxu0 0
    %444 = vmatpush1.bf16.msra.mxu0 %v424
    %445 = vmatprep.subr.bf16.mxu0 0
    %446 = vmatpush1.bf16.msra.mxu0 %v425
    %447 = vmatprep.subr.bf16.mxu0 0
    %448 = vmatpush1.bf16.msra.mxu0 %v426
    %449 = vmatprep.subr.bf16.mxu0 0
    %450 = vmatpush1.bf16.msra.mxu0 %v427
    %451 = vmatprep.subr.bf16.mxu0 0
    %452 = vmatpush1.bf16.msra.mxu0 %v428
    %453 = vmatprep.subr.bf16.mxu0 0
    %454 = vmatpush1.bf16.msra.mxu0 0
    %455 = vmatprep.subr.bf16.mxu0 0
    %456 = vmatpush1.bf16.msra.mxu0 0
    %457 = vmatprep.subr.bf16.mxu0 0
    %458 = vmatpush1.bf16.msra.mxu0 0
    %459 = vmatprep.subr.bf16.mxu0 0
    %460 = vmatpush1.bf16.msra.mxu0 0
    %461 = vmatprep.subr.bf16.mxu0 0
    %462 = vmatpush1.bf16.msra.mxu0 0
    %463 = vmatprep.subr.bf16.mxu0 0
    %464 = vmatpush1.bf16.msra.mxu0 0
    %465 = vmatprep.subr.bf16.mxu0 0
    %466 = vmatpush1.bf16.msra.mxu0 0
    %467 = vmatprep.subr.bf16.mxu0 0
    %468 = vmatpush1.bf16.msra.mxu0 0
    %469 = vmatprep.mubr.bf16.mxu0 0
    %470 = vmatmul.mubr.bf16.gmra.mrb[0].mxu0 %v365
    %v471 = vpop.f32.mrb[0].mxu0
    %v472 = vadd.f32 %v387, %v471
    %v473 = vpop.f32.mrb[0].mxu0
    %v474 = vpop.f32.mrb[0].mxu0
    %v475 = vpop.f32.mrb[0].mxu0
    %476 = vdwg.mxu0
    %v477 = vunpack.c.l.bf16 %v252
    %v478 = vadd.f32 %v472, %v477
    %v479 = vmax.f32 %v478, 0.0
    %v480 = vpack.c.bf16 %v479, %v479
    %v481 = vld [vmem:[#allocation10] sm:$0xf]
    %v482 = vld [vmem:[#allocation10 + $0x4] sm:$0xf]
    %v483 = vld [vmem:[#allocation10 + $0x8] sm:$0xf]
    %v484 = vld [vmem:[#allocation10 + $0xc] sm:$0xf]
    %v485 = vld [vmem:[#allocation10 + $0x10] sm:$0xf]
    %v486 = vld [vmem:[#allocation10 + $0x14] sm:$0xf]
    %v487 = vld [vmem:[#allocation10 + $0x18] sm:$0xf]
    %v488 = vld [vmem:[#allocation10 + $0x1c] sm:$0xf]
    %v489 = vld [vmem:[#allocation10 + $0x20] sm:$0xf]
    %v490 = vld [vmem:[#allocation10 + $0x24] sm:$0xf]
    %v491 = vld [vmem:[#allocation10 + $0x28] sm:$0xf]
    %v492 = vld [vmem:[#allocation10 + $0x2c] sm:$0xf]
    %v493 = vld [vmem:[#allocation10 + $0x30] sm:$0xf]
    %v494 = vld [vmem:[#allocation10 + $0x34] sm:$0xf]
    %v495 = vld [vmem:[#allocation10 + $0x38] sm:$0xf]
    %v496 = vld [vmem:[#allocation10 + $0x3c] sm:$0xf]
    %v497 = vld [vmem:[%s8] sm:$0x1]
    %v499 = vlaneseq
    %v500 = vshrl.u32 %v499, 7
    %v501 = vsub.s32 0, %v500
    %v502 = vrot.slane %v497, %v501
    %v520 = vunpack.c.l.b16 %v481
    %v521 = vunpack.c.l.b16 %v482
    %v522 = vunpack.c.l.b16 %v483
    %v523 = vunpack.c.l.b16 %v484
    %v524 = vunpack.c.l.b16 %v485
    %v525 = vunpack.c.l.b16 %v486
    %v526 = vunpack.c.l.b16 %v487
    %v527 = vunpack.c.l.b16 %v488
    %v528 = vunpack.c.l.b16 %v489
    %v529 = vunpack.c.l.b16 %v490
    %v530 = vunpack.c.l.b16 %v491
    %v531 = vunpack.c.l.b16 %v492
    %v532 = vunpack.c.l.b16 %v493
    %v533 = vunpack.c.l.b16 %v494
    %v534 = vunpack.c.l.b16 %v495
    %v535 = vunpack.c.l.b16 %v496
    %v536 = vpack.c.b16 %v521, %v520
    %v537 = vpack.c.b16 %v523, %v522
    %v538 = vpack.c.b16 %v525, %v524
    %v539 = vpack.c.b16 %v527, %v526
    %v540 = vpack.c.b16 %v529, %v528
    %v541 = vpack.c.b16 %v531, %v530
    %v542 = vpack.c.b16 %v533, %v532
    %v543 = vpack.c.b16 %v535, %v534
    %552 = vmatprep.subr.bf16.mxu0 0
    %553 = vmatpush1.bf16.msra.mxu0 %v536
    %554 = vmatprep.subr.bf16.mxu0 0
    %555 = vmatpush1.bf16.msra.mxu0 %v537
    %556 = vmatprep.subr.bf16.mxu0 0
    %557 = vmatpush1.bf16.msra.mxu0 %v538
    %558 = vmatprep.subr.bf16.mxu0 0
    %559 = vmatpush1.bf16.msra.mxu0 %v539
    %560 = vmatprep.subr.bf16.mxu0 0
    %561 = vmatpush1.bf16.msra.mxu0 %v540
    %562 = vmatprep.subr.bf16.mxu0 0
    %563 = vmatpush1.bf16.msra.mxu0 %v541
    %564 = vmatprep.subr.bf16.mxu0 0
    %565 = vmatpush1.bf16.msra.mxu0 %v542
    %566 = vmatprep.subr.bf16.mxu0 0
    %567 = vmatpush1.bf16.msra.mxu0 %v543
    %568 = vmatprep.subr.bf16.mxu0 0
    %569 = vmatpush1.bf16.msra.mxu0 0
    %570 = vmatprep.subr.bf16.mxu0 0
    %571 = vmatpush1.bf16.msra.mxu0 0
    %572 = vmatprep.subr.bf16.mxu0 0
    %573 = vmatpush1.bf16.msra.mxu0 0
    %574 = vmatprep.subr.bf16.mxu0 0
    %575 = vmatpush1.bf16.msra.mxu0 0
    %576 = vmatprep.subr.bf16.mxu0 0
    %577 = vmatpush1.bf16.msra.mxu0 0
    %578 = vmatprep.subr.bf16.mxu0 0
    %579 = vmatpush1.bf16.msra.mxu0 0
    %580 = vmatprep.subr.bf16.mxu0 0
    %581 = vmatpush1.bf16.msra.mxu0 0
    %582 = vmatprep.subr.bf16.mxu0 0
    %583 = vmatpush1.bf16.msra.mxu0 0
    %584 = vmatprep.mubr.bf16.mxu0 0
    %585 = vmatmul.mubr.bf16.gmra.mrb[0].mxu0 %v480
    %v586 = vpop.f32.mrb[0].mxu0
    %v587 = vadd.f32 %v502, %v586
    %v588 = vpop.f32.mrb[0].mxu0
    %v589 = vpop.f32.mrb[0].mxu0
    %v590 = vpop.f32.mrb[0].mxu0
    %591 = vdwg.mxu0
    %v592 = vmax.f32 %v587, 0.0
    %v593 = vpack.c.bf16 %v592, %v592
    %v594 = vld [vmem:[#allocation11] sm:$0xf]
    %v595 = vld [vmem:[#allocation11 + $0x4] sm:$0xf]
    %v596 = vld [vmem:[#allocation11 + $0x8] sm:$0xf]
    %v597 = vld [vmem:[#allocation11 + $0xc] sm:$0xf]
    %v598 = vld [vmem:[#allocation11 + $0x10] sm:$0xf]
    %v599 = vld [vmem:[#allocation11 + $0x14] sm:$0xf]
    %v600 = vld [vmem:[#allocation11 + $0x18] sm:$0xf]
    %v601 = vld [vmem:[#allocation11 + $0x1c] sm:$0xf]
    %v602 = vld [vmem:[#allocation11 + $0x20] sm:$0xf]
    %v603 = vld [vmem:[#allocation11 + $0x24] sm:$0xf]
    %v604 = vld [vmem:[#allocation11 + $0x28] sm:$0xf]
    %v605 = vld [vmem:[#allocation11 + $0x2c] sm:$0xf]
    %v606 = vld [vmem:[#allocation11 + $0x30] sm:$0xf]
    %v607 = vld [vmem:[#allocation11 + $0x34] sm:$0xf]
    %v608 = vld [vmem:[#allocation11 + $0x38] sm:$0xf]
    %v609 = vld [vmem:[#allocation11 + $0x3c] sm:$0xf]
    %v610 = vld [vmem:[%s10] sm:$0x1]
    %v612 = vlaneseq
    %v613 = vshrl.u32 %v612, 7
    %v614 = vsub.s32 0, %v613
    %v615 = vrot.slane %v610, %v614
    %v633 = vunpack.c.l.b16 %v594
    %v634 = vunpack.c.l.b16 %v595
    %v635 = vunpack.c.l.b16 %v596
    %v636 = vunpack.c.l.b16 %v597
    %v637 = vunpack.c.l.b16 %v598
    %v638 = vunpack.c.l.b16 %v599
    %v639 = vunpack.c.l.b16 %v600
    %v640 = vunpack.c.l.b16 %v601
    %v641 = vunpack.c.l.b16 %v602
    %v642 = vunpack.c.l.b16 %v603
    %v643 = vunpack.c.l.b16 %v604
    %v644 = vunpack.c.l.b16 %v605
    %v645 = vunpack.c.l.b16 %v606
    %v646 = vunpack.c.l.b16 %v607
    %v647 = vunpack.c.l.b16 %v608
    %v648 = vunpack.c.l.b16 %v609
    %v649 = vpack.c.b16 %v634, %v633
    %v650 = vpack.c.b16 %v636, %v635
    %v651 = vpack.c.b16 %v638, %v637
    %v652 = vpack.c.b16 %v640, %v639
    %v653 = vpack.c.b16 %v642, %v641
    %v654 = vpack.c.b16 %v644, %v643
    %v655 = vpack.c.b16 %v646, %v645
    %v656 = vpack.c.b16 %v648, %v647
    %665 = vmatprep.subr.bf16.mxu0 0
    %666 = vmatpush1.bf16.msra.mxu0 %v649
    %667 = vmatprep.subr.bf16.mxu0 0
    %668 = vmatpush1.bf16.msra.mxu0 %v650
    %669 = vmatprep.subr.bf16.mxu0 0
    %670 = vmatpush1.bf16.msra.mxu0 %v651
    %671 = vmatprep.subr.bf16.mxu0 0
    %672 = vmatpush1.bf16.msra.mxu0 %v652
    %673 = vmatprep.subr.bf16.mxu0 0
    %674 = vmatpush1.bf16.msra.mxu0 %v653
    %675 = vmatprep.subr.bf16.mxu0 0
    %676 = vmatpush1.bf16.msra.mxu0 %v654
    %677 = vmatprep.subr.bf16.mxu0 0
    %678 = vmatpush1.bf16.msra.mxu0 %v655
    %679 = vmatprep.subr.bf16.mxu0 0
    %680 = vmatpush1.bf16.msra.mxu0 %v656
    %681 = vmatprep.subr.bf16.mxu0 0
    %682 = vmatpush1.bf16.msra.mxu0 0
    %683 = vmatprep.subr.bf16.mxu0 0
    %684 = vmatpush1.bf16.msra.mxu0 0
    %685 = vmatprep.subr.bf16.mxu0 0
    %686 = vmatpush1.bf16.msra.mxu0 0
    %687 = vmatprep.subr.bf16.mxu0 0
    %688 = vmatpush1.bf16.msra.mxu0 0
    %689 = vmatprep.subr.bf16.mxu0 0
    %690 = vmatpush1.bf16.msra.mxu0 0
    %691 = vmatprep.subr.bf16.mxu0 0
    %692 = vmatpush1.bf16.msra.mxu0 0
    %693 = vmatprep.subr.bf16.mxu0 0
    %694 = vmatpush1.bf16.msra.mxu0 0
    %695 = vmatprep.subr.bf16.mxu0 0
    %696 = vmatpush1.bf16.msra.mxu0 0
    %697 = vmatprep.mubr.bf16.mxu0 0
    %698 = vmatmul.mubr.bf16.gmra.mrb[0].mxu0 %v593
    %v699 = vpop.f32.mrb[0].mxu0
    %v700 = vadd.f32 %v615, %v699
    %v701 = vpop.f32.mrb[0].mxu0
    %v702 = vpop.f32.mrb[0].mxu0
    %v703 = vpop.f32.mrb[0].mxu0
    %704 = vdwg.mxu0
    %v705 = vunpack.c.l.bf16 %v480
    %v706 = vadd.f32 %v700, %v705
    %v707 = vmax.f32 %v706, 0.0
    %v708 = vpack.c.bf16 %v707, %v707
    %v709 = vld [vmem:[#allocation13] sm:$0xf]
    %v710 = vld [vmem:[#allocation13 + $0x4] sm:$0xf]
    %v711 = vld [vmem:[#allocation13 + $0x8] sm:$0xf]
    %v712 = vld [vmem:[#allocation13 + $0xc] sm:$0xf]
    %v713 = vld [vmem:[#allocation13 + $0x10] sm:$0xf]
    %v714 = vld [vmem:[#allocation13 + $0x14] sm:$0xf]
    %v715 = vld [vmem:[#allocation13 + $0x18] sm:$0xf]
    %v716 = vld [vmem:[#allocation13 + $0x1c] sm:$0xf]
    %v717 = vld [vmem:[#allocation13 + $0x20] sm:$0xf]
    %v718 = vld [vmem:[#allocation13 + $0x24] sm:$0xf]
    %v719 = vld [vmem:[#allocation13 + $0x28] sm:$0xf]
    %v720 = vld [vmem:[#allocation13 + $0x2c] sm:$0xf]
    %v721 = vld [vmem:[#allocation13 + $0x30] sm:$0xf]
    %v722 = vld [vmem:[#allocation13 + $0x34] sm:$0xf]
    %v723 = vld [vmem:[#allocation13 + $0x38] sm:$0xf]
    %v724 = vld [vmem:[#allocation13 + $0x3c] sm:$0xf]
    %v725 = vld [vmem:[%s12] sm:$0x1]
    %v727 = vlaneseq
    %v728 = vshrl.u32 %v727, 7
    %v729 = vsub.s32 0, %v728
    %v730 = vrot.slane %v725, %v729
    %v748 = vunpack.c.l.b16 %v709
    %v749 = vunpack.c.l.b16 %v710
    %v750 = vunpack.c.l.b16 %v711
    %v751 = vunpack.c.l.b16 %v712
    %v752 = vunpack.c.l.b16 %v713
    %v753 = vunpack.c.l.b16 %v714
    %v754 = vunpack.c.l.b16 %v715
    %v755 = vunpack.c.l.b16 %v716
    %v756 = vunpack.c.l.b16 %v717
    %v757 = vunpack.c.l.b16 %v718
    %v758 = vunpack.c.l.b16 %v719
    %v759 = vunpack.c.l.b16 %v720
    %v760 = vunpack.c.l.b16 %v721
    %v761 = vunpack.c.l.b16 %v722
    %v762 = vunpack.c.l.b16 %v723
    %v763 = vunpack.c.l.b16 %v724
    %v764 = vpack.c.b16 %v749, %v748
    %v765 = vpack.c.b16 %v751, %v750
    %v766 = vpack.c.b16 %v753, %v752
    %v767 = vpack.c.b16 %v755, %v754
    %v768 = vpack.c.b16 %v757, %v756
    %v769 = vpack.c.b16 %v759, %v758
    %v770 = vpack.c.b16 %v761, %v760
    %v771 = vpack.c.b16 %v763, %v762
    %780 = vmatprep.subr.bf16.mxu0 0
    %781 = vmatpush1.bf16.msra.mxu0 %v764
    %782 = vmatprep.subr.bf16.mxu0 0
    %783 = vmatpush1.bf16.msra.mxu0 %v765
    %784 = vmatprep.subr.bf16.mxu0 0
    %785 = vmatpush1.bf16.msra.mxu0 %v766
    %786 = vmatprep.subr.bf16.mxu0 0
    %787 = vmatpush1.bf16.msra.mxu0 %v767
    %788 = vmatprep.subr.bf16.mxu0 0
    %789 = vmatpush1.bf16.msra.mxu0 %v768
    %790 = vmatprep.subr.bf16.mxu0 0
    %791 = vmatpush1.bf16.msra.mxu0 %v769
    %792 = vmatprep.subr.bf16.mxu0 0
    %793 = vmatpush1.bf16.msra.mxu0 %v770
    %794 = vmatprep.subr.bf16.mxu0 0
    %795 = vmatpush1.bf16.msra.mxu0 %v771
    %796 = vmatprep.subr.bf16.mxu0 0
    %797 = vmatpush1.bf16.msra.mxu0 0
    %798 = vmatprep.subr.bf16.mxu0 0
    %799 = vmatpush1.bf16.msra.mxu0 0
    %800 = vmatprep.subr.bf16.mxu0 0
    %801 = vmatpush1.bf16.msra.mxu0 0
    %802 = vmatprep.subr.bf16.mxu0 0
    %803 = vmatpush1.bf16.msra.mxu0 0
    %804 = vmatprep.subr.bf16.mxu0 0
    %805 = vmatpush1.bf16.msra.mxu0 0
    %806 = vmatprep.subr.bf16.mxu0 0
    %807 = vmatpush1.bf16.msra.mxu0 0
    %808 = vmatprep.subr.bf16.mxu0 0
    %809 = vmatpush1.bf16.msra.mxu0 0
    %810 = vmatprep.subr.bf16.mxu0 0
    %811 = vmatpush1.bf16.msra.mxu0 0
    %812 = vmatprep.mubr.bf16.mxu0 0
    %813 = vmatmul.mubr.bf16.gmra.mrb[0].mxu0 %v708
    %v814 = vpop.f32.mrb[0].mxu0
    %v815 = vadd.f32 %v730, %v814
    %v816 = vpop.f32.mrb[0].mxu0
    %v817 = vpop.f32.mrb[0].mxu0
    %v818 = vpop.f32.mrb[0].mxu0
    %819 = vdwg.mxu0
    %v820 = vpack.c.bf16 %v815, %v815
    %821 = vst [vmem:[#allocation14] sm:$0xf] %v820
    // Predicated region
    $region82: #{tpu_custom_call.1} parent=1 // pred_check
      _
    $region83: #{tpu_custom_call.1} parent=1 // pred_check_branch
      %823 = sbr.rel (0) target = $region85
    $region84: #{tpu_custom_call.1} parent=1 // pred_region
      %s825 = ssub.s32 64, 64
      %826 = vsyncadd [#allocation4], %s825
      %s828 = sshll.u32 [#allocation14], 4
      %s829 = int_to_ptr.vmem [resolvable:$true] %s828
      %831 = dma.vmem_to_hbm [thread:$0]  %s829, 64, %s13, [#allocation4]
    $region85: #{tpu_custom_call.1} parent=1 // pred_fallthru
      _
    // Predicated region
    $region86: #{tpu_custom_call.1} parent=1 // pred_check
      _
    $region87: #{tpu_custom_call.1} parent=1 // pred_check_branch
      %833 = sbr.rel (0) target = $region89
    $region88: #{tpu_custom_call.1} parent=1 // pred_region
      %834 = dma.done [#allocation4], 64
    $region89: #{tpu_custom_call.1} parent=1 // pred_fallthru
      _
    %835 = vsyncpa [#allocation3], 1
    %836 = vsyncpa [#allocation6], 1
    %837 = vsyncpa [#allocation9], 1
    %838 = vsyncpa [#allocation12], 1
    %839 = vsyncpa [#allocation4], 1

// kernel: tpu_custom_call.1
$region0: #{tpu_custom_call.1}
  #allocation0 [shape = 'u32[]', space=smem, size = 0x4, offset = 0x4, fixed_abs, tag = 'smem constant byte address 0x4 - core index']
  #allocation1 [shape = 'u32[144,128]{1,0:T(1,128)}', space=vmem, size = 0x12000, scoped, tag = 'internal scratch']
  %s0 = inlined_call_operand.hbm [shape: bf16[8,128], index: 0, kind: input, shape index: {}]
  %s1 = inlined_call_operand.hbm [shape: bf16[128,128], index: 1, kind: input, shape index: {}]
  %s2 = inlined_call_operand.vmem [shape: f32[1,128], index: 2, kind: input, shape index: {}]
  %s3 = inlined_call_operand.hbm [shape: bf16[128,128], index: 3, kind: input, shape index: {}]
  %s4 = inlined_call_operand.vmem [shape: f32[1,128], index: 4, kind: input, shape index: {}]
  %s5 = inlined_call_operand.hbm [shape: bf16[128,128], index: 5, kind: input, shape index: {}]
  %s6 = inlined_call_operand.vmem [shape: f32[1,128], index: 6, kind: input, shape index: {}]
  %s7 = inlined_call_operand.hbm [shape: bf16[128,128], index: 7, kind: input, shape index: {}]
  %s8 = inlined_call_operand.vmem [shape: f32[1,128], index: 8, kind: input, shape index: {}]
  %s9 = inlined_call_operand.hbm [shape: bf16[128,128], index: 9, kind: input, shape index: {}]
  %s10 = inlined_call_operand.vmem [shape: f32[1,128], index: 10, kind: input, shape index: {}]
  %s11 = inlined_call_operand.hbm [shape: bf16[128,128], index: 11, kind: input, shape index: {}]
  %s12 = inlined_call_operand.vmem [shape: f32[1,128], index: 12, kind: input, shape index: {}]
  %s13 = inlined_call_operand.hbm [shape: bf16[8,128], index: 13, kind: output, shape index: {}]
  %s14 = sld [smem:[#allocation0]]
  $region90: #{tpu_custom_call.1} parent=0
    _
  %s16 = ssub.s32 1, %s14
  %s17 = scalar_select 0, %s16, %s14
  $region1: #{tpu_custom_call.1} parent=0
    #allocation2 [shape = 'u8[2048]{0}', space=vmem, size = 0x800, scoped, tag = 'input window, operand 0, single buffered']
    #allocation3 [shape = 's32[1]{0}', space=sflag, size = 0x4, scoped, tag = 'scoped memory for tpu_custom_call.1']
    #allocation4 [shape = 's32[1]{0}', space=sflag, size = 0x4, scoped, tag = 'scoped memory for tpu_custom_call.1']
    #allocation5 [shape = 'u8[32768]{0}', space=vmem, size = 0x8000, scoped, tag = 'input window, operand 1, single buffered']
    #allocation6 [shape = 's32[1]{0}', space=sflag, size = 0x4, scoped, tag = 'scoped memory for tpu_custom_call.1']
    #allocation7 [shape = 'u8[32768]{0}', space=vmem, size = 0x8000, scoped, tag = 'input window, operand 3, single buffered']
    #allocation8 [shape = 'u8[32768]{0}', space=vmem, size = 0x8000, scoped, tag = 'input window, operand 5, single buffered']
    #allocation9 [shape = 's32[1]{0}', space=sflag, size = 0x4, scoped, tag = 'scoped memory for tpu_custom_call.1']
    #allocation10 [shape = 'u8[32768]{0}', space=vmem, size = 0x8000, scoped, tag = 'input window, operand 7, single buffered']
    #allocation11 [shape = 'u8[32768]{0}', space=vmem, size = 0x8000, scoped, tag = 'input window, operand 9, single buffered']
    #allocation12 [shape = 's32[1]{0}', space=sflag, size = 0x4, scoped, tag = 'scoped memory for tpu_custom_call.1']
    #allocation13 [shape = 'u8[32768]{0}', space=vmem, size = 0x8000, scoped, tag = 'input window, operand 11, single buffered']
    #allocation14 [shape = 'u8[2048]{0}', space=vmem, size = 0x800, scoped, tag = 'output window, operand 0, single buffered']
    %18 = vsyncpa [#allocation3], 0
    %19 = vsyncpa [#allocation6], 0
    %20 = vsyncpa [#allocation9], 0
    %21 = vsyncpa [#allocation12], 0
    %22 = vsyncpa [#allocation4], 0
    // Predicated region
    $region2: #{tpu_custom_call.1} parent=1 // pred_check
      _
    $region3: #{tpu_custom_call.1} parent=1 // pred_check_branch
      %24 = sbr.rel (0) target = $region5
    $region4: #{tpu_custom_call.1} parent=1 // pred_region
      %s26 = ssub.s32 64, 64
      %27 = vsyncadd [#allocation3], %s26
      %s29 = sshll.u32 [#allocation2], 4
      %s30 = int_to_ptr.vmem [resolvable:$true] %s29
      %32 = dma.hbm_to_vmem [thread:$0]  %s0, 64, %s30, [#allocation3]
    $region5: #{tpu_custom_call.1} parent=1 // pred_fallthru
      _
    // Predicated region
    $region6: #{tpu_custom_call.1} parent=1 // pred_check
      _
    $region7: #{tpu_custom_call.1} parent=1 // pred_check_branch
      %34 = sbr.rel (0) target = $region9
    $region8: #{tpu_custom_call.1} parent=1 // pred_region
      %s36 = ssub.s32 1024, 1024
      %37 = vsyncadd [#allocation6], %s36
      %s38 = sshll.u32 [#allocation5], 4
      %s39 = int_to_ptr.vmem [resolvable:$true] %s38
      %44 = dma.hbm_to_vmem [thread:$0]  %s1, 1024, %s39, [#allocation6], 64, 64, 4
    $region9: #{tpu_custom_call.1} parent=1 // pred_fallthru
      _
    // Predicated region
    $region10: #{tpu_custom_call.1} parent=1 // pred_check
      _
    $region11: #{tpu_custom_call.1} parent=1 // pred_check_branch
      %46 = sbr.rel (0) target = $region13
    $region12: #{tpu_custom_call.1} parent=1 // pred_region
      _
    $region13: #{tpu_custom_call.1} parent=1 // pred_fallthru
      _
    // Predicated region
    $region14: #{tpu_custom_call.1} parent=1 // pred_check
      _
    $region15: #{tpu_custom_call.1} parent=1 // pred_check_branch
      %48 = sbr.rel (0) target = $region17
    $region16: #{tpu_custom_call.1} parent=1 // pred_region
      %s50 = ssub.s32 1024, 1024
      %51 = vsyncadd [#allocation6], %s50
      %s52 = sshll.u32 [#allocation7], 4
      %s53 = int_to_ptr.vmem [resolvable:$true] %s52
      %58 = dma.hbm_to_vmem [thread:$0]  %s3, 1024, %s53, [#allocation6], 64, 64, 4
    $region17: #{tpu_custom_call.1} parent=1 // pred_fallthru
      _
    // Predicated region
    $region18: #{tpu_custom_call.1} parent=1 // pred_check
      _
    $region19: #{tpu_custom_call.1} parent=1 // pred_check_branch
      %60 = sbr.rel (0) target = $region21
    $region20: #{tpu_custom_call.1} parent=1 // pred_region
      _
    $region21: #{tpu_custom_call.1} parent=1 // pred_fallthru
      _
    // Predicated region
    $region22: #{tpu_custom_call.1} parent=1 // pred_check
      _
    $region23: #{tpu_custom_call.1} parent=1 // pred_check_branch
      %62 = sbr.rel (0) target = $region25
    $region24: #{tpu_custom_call.1} parent=1 // pred_region
      %s64 = ssub.s32 1024, 1024
      %65 = vsyncadd [#allocation9], %s64
      %s66 = sshll.u32 [#allocation8], 4
      %s67 = int_to_ptr.vmem [resolvable:$true] %s66
      %72 = dma.hbm_to_vmem [thread:$0]  %s5, 1024, %s67, [#allocation9], 64, 64, 4
    $region25: #{tpu_custom_call.1} parent=1 // pred_fallthru
      _
    // Predicated region
    $region26: #{tpu_custom_call.1} parent=1 // pred_check
      _
    $region27: #{tpu_custom_call.1} parent=1 // pred_check_branch
      %74 = sbr.rel (0) target = $region29
    $region28: #{tpu_custom_call.1} parent=1 // pred_region
      _
    $region29: #{tpu_custom_call.1} parent=1 // pred_fallthru
      _
    // Predicated region
    $region30: #{tpu_custom_call.1} parent=1 // pred_check
      _
    $region31: #{tpu_custom_call.1} parent=1 // pred_check_branch
      %76 = sbr.rel (0) target = $region33
    $region32: #{tpu_custom_call.1} parent=1 // pred_region
      %s78 = ssub.s32 1024, 1024
      %79 = vsyncadd [#allocation9], %s78
      %s80 = sshll.u32 [#allocation10], 4
      %s81 = int_to_ptr.vmem [resolvable:$true] %s80
      %86 = dma.hbm_to_vmem [thread:$0]  %s7, 1024, %s81, [#allocation9], 64, 64, 4
    $region33: #{tpu_custom_call.1} parent=1 // pred_fallthru
      _
    // Predicated region
    $region34: #{tpu_custom_call.1} parent=1 // pred_check
      _
    $region35: #{tpu_custom_call.1} parent=1 // pred_check_branch
      %88 = sbr.rel (0) target = $region37
    $region36: #{tpu_custom_call.1} parent=1 // pred_region
      _
    $region37: #{tpu_custom_call.1} parent=1 // pred_fallthru
      _
    // Predicated region
    $region38: #{tpu_custom_call.1} parent=1 // pred_check
      _
    $region39: #{tpu_custom_call.1} parent=1 // pred_check_branch
      %90 = sbr.rel (0) target = $region41
    $region40: #{tpu_custom_call.1} parent=1 // pred_region
      %s92 = ssub.s32 1024, 1024
      %93 = vsyncadd [#allocation12], %s92
      %s94 = sshll.u32 [#allocation11], 4
      %s95 = int_to_ptr.vmem [resolvable:$true] %s94
      %100 = dma.hbm_to_vmem [thread:$0]  %s9, 1024, %s95, [#allocation12], 64, 64, 4
    $region41: #{tpu_custom_call.1} parent=1 // pred_fallthru
      _
    // Predicated region
    $region42: #{tpu_custom_call.1} parent=1 // pred_check
      _
    $region43: #{tpu_custom_call.1} parent=1 // pred_check_branch
      %102 = sbr.rel (0) target = $region45
    $region44: #{tpu_custom_call.1} parent=1 // pred_region
      _
    $region45: #{tpu_custom_call.1} parent=1 // pred_fallthru
      _
    // Predicated region
    $region46: #{tpu_custom_call.1} parent=1 // pred_check
      _
    $region47: #{tpu_custom_call.1} parent=1 // pred_check_branch
      %104 = sbr.rel (0) target = $region49
    $region48: #{tpu_custom_call.1} parent=1 // pred_region
      %s106 = ssub.s32 1024, 1024
      %107 = vsyncadd [#allocation12], %s106
      %s108 = sshll.u32 [#allocation13], 4
      %s109 = int_to_ptr.vmem [resolvable:$true] %s108
      %114 = dma.hbm_to_vmem [thread:$0]  %s11, 1024, %s109, [#allocation12], 64, 64, 4
    $region49: #{tpu_custom_call.1} parent=1 // pred_fallthru
      _
    // Predicated region
    $region50: #{tpu_custom_call.1} parent=1 // pred_check
      _
    $region51: #{tpu_custom_call.1} parent=1 // pred_check_branch
      %116 = sbr.rel (0) target = $region53
    $region52: #{tpu_custom_call.1} parent=1 // pred_region
      _
    $region53: #{tpu_custom_call.1} parent=1 // pred_fallthru
      _
    // Predicated region
    $region54: #{tpu_custom_call.1} parent=1 // pred_check
      _
    $region55: #{tpu_custom_call.1} parent=1 // pred_check_branch
      %118 = sbr.rel (0) target = $region57
    $region56: #{tpu_custom_call.1} parent=1 // pred_region
      %119 = dma.done [#allocation3], 64
    $region57: #{tpu_custom_call.1} parent=1 // pred_fallthru
      _
    // Predicated region
    $region58: #{tpu_custom_call.1} parent=1 // pred_check
      _
    $region59: #{tpu_custom_call.1} parent=1 // pred_check_branch
      %121 = sbr.rel (0) target = $region61
    $region60: #{tpu_custom_call.1} parent=1 // pred_region
      %122 = dma.done [#allocation6], 1024
    $region61: #{tpu_custom_call.1} parent=1 // pred_fallthru
      _
    // Predicated region
    $region62: #{tpu_custom_call.1} parent=1 // pred_check
      _
    $region63: #{tpu_custom_call.1} parent=1 // pred_check_branch
      %124 = sbr.rel (0) target = $region65
    $region64: #{tpu_custom_call.1} parent=1 // pred_region
      %125 = dma.done [#allocation6], 1024
    $region65: #{tpu_custom_call.1} parent=1 // pred_fallthru
      _
    // Predicated region
    $region66: #{tpu_custom_call.1} parent=1 // pred_check
      _
    $region67: #{tpu_custom_call.1} parent=1 // pred_check_branch
      %127 = sbr.rel (0) target = $region69
    $region68: #{tpu_custom_call.1} parent=1 // pred_region
      %128 = dma.done [#allocation9], 1024
    $region69: #{tpu_custom_call.1} parent=1 // pred_fallthru
      _
    // Predicated region
    $region70: #{tpu_custom_call.1} parent=1 // pred_check
      _
    $region71: #{tpu_custom_call.1} parent=1 // pred_check_branch
      %130 = sbr.rel (0) target = $region73
    $region72: #{tpu_custom_call.1} parent=1 // pred_region
      %131 = dma.done [#allocation9], 1024
    $region73: #{tpu_custom_call.1} parent=1 // pred_fallthru
      _
    // Predicated region
    $region74: #{tpu_custom_call.1} parent=1 // pred_check
      _
    $region75: #{tpu_custom_call.1} parent=1 // pred_check_branch
      %133 = sbr.rel (0) target = $region77
    $region76: #{tpu_custom_call.1} parent=1 // pred_region
      %134 = dma.done [#allocation12], 1024
    $region77: #{tpu_custom_call.1} parent=1 // pred_fallthru
      _
    // Predicated region
    $region78: #{tpu_custom_call.1} parent=1 // pred_check
      _
    $region79: #{tpu_custom_call.1} parent=1 // pred_check_branch
      %136 = sbr.rel (0) target = $region81
    $region80: #{tpu_custom_call.1} parent=1 // pred_region
      %137 = dma.done [#allocation12], 1024
    $region81: #{tpu_custom_call.1} parent=1 // pred_fallthru
      _
    %v139 = vld [vmem:[#allocation2] sm:$0xf]
    %v140 = vld [vmem:[#allocation5] sm:$0xf]
    %v141 = vld [vmem:[#allocation5 + $0x4] sm:$0xf]
    %v142 = vld [vmem:[#allocation5 + $0x8] sm:$0xf]
    %v143 = vld [vmem:[#allocation5 + $0xc] sm:$0xf]
    %v144 = vld [vmem:[#allocation5 + $0x10] sm:$0xf]
    %v145 = vld [vmem:[#allocation5 + $0x14] sm:$0xf]
    %v146 = vld [vmem:[#allocation5 + $0x18] sm:$0xf]
    %v147 = vld [vmem:[#allocation5 + $0x1c] sm:$0xf]
    %v148 = vld [vmem:[#allocation5 + $0x20] sm:$0xf]
    %v149 = vld [vmem:[#allocation5 + $0x24] sm:$0xf]
    %v150 = vld [vmem:[#allocation5 + $0x28] sm:$0xf]
    %v151 = vld [vmem:[#allocation5 + $0x2c] sm:$0xf]
    %v152 = vld [vmem:[#allocation5 + $0x30] sm:$0xf]
    %v153 = vld [vmem:[#allocation5 + $0x34] sm:$0xf]
    %v154 = vld [vmem:[#allocation5 + $0x38] sm:$0xf]
    %v155 = vld [vmem:[#allocation5 + $0x3c] sm:$0xf]
    %v156 = vld [vmem:[%s2] sm:$0x1]
    %v158 = vlaneseq
    %v159 = vshrl.u32 %v158, 7
    %v160 = vsub.s32 0, %v159
    %v161 = vrot.slane %v156, %v160
    %v179 = vunpack.c.l.b16 %v140
    %v180 = vunpack.c.l.b16 %v141
    %v181 = vunpack.c.l.b16 %v142
    %v182 = vunpack.c.l.b16 %v143
    %v183 = vunpack.c.l.b16 %v144
    %v184 = vunpack.c.l.b16 %v145
    %v185 = vunpack.c.l.b16 %v146
    %v186 = vunpack.c.l.b16 %v147
    %v187 = vunpack.c.l.b16 %v148
    %v188 = vunpack.c.l.b16 %v149
    %v189 = vunpack.c.l.b16 %v150
    %v190 = vunpack.c.l.b16 %v151
    %v191 = vunpack.c.l.b16 %v152
    %v192 = vunpack.c.l.b16 %v153
    %v193 = vunpack.c.l.b16 %v154
    %v194 = vunpack.c.l.b16 %v155
    %v195 = vpack.c.b16 %v180, %v179
    %v196 = vpack.c.b16 %v182, %v181
    %v197 = vpack.c.b16 %v184, %v183
    %v198 = vpack.c.b16 %v186, %v185
    %v199 = vpack.c.b16 %v188, %v187
    %v200 = vpack.c.b16 %v190, %v189
    %v201 = vpack.c.b16 %v192, %v191
    %v202 = vpack.c.b16 %v194, %v193
    %211 = vmatprep.subr.bf16.mxu0 0
    %212 = vmatpush1.bf16.msra.mxu0 %v195
    %213 = vmatprep.subr.bf16.mxu0 0
    %214 = vmatpush1.bf16.msra.mxu0 %v196
    %215 = vmatprep.subr.bf16.mxu0 0
    %216 = vmatpush1.bf16.msra.mxu0 %v197
    %217 = vmatprep.subr.bf16.mxu0 0
    %218 = vmatpush1.bf16.msra.mxu0 %v198
    %219 = vmatprep.subr.bf16.mxu0 0
    %220 = vmatpush1.bf16.msra.mxu0 %v199
    %221 = vmatprep.subr.bf16.mxu0 0
    %222 = vmatpush1.bf16.msra.mxu0 %v200
    %223 = vmatprep.subr.bf16.mxu0 0
    %224 = vmatpush1.bf16.msra.mxu0 %v201
    %225 = vmatprep.subr.bf16.mxu0 0
    %226 = vmatpush1.bf16.msra.mxu0 %v202
    %227 = vmatprep.subr.bf16.mxu0 0
    %228 = vmatpush1.bf16.msra.mxu0 0
    %229 = vmatprep.subr.bf16.mxu0 0
    %230 = vmatpush1.bf16.msra.mxu0 0
    %231 = vmatprep.subr.bf16.mxu0 0
    %232 = vmatpush1.bf16.msra.mxu0 0
    %233 = vmatprep.subr.bf16.mxu0 0
    %234 = vmatpush1.bf16.msra.mxu0 0
    %235 = vmatprep.subr.bf16.mxu0 0
    %236 = vmatpush1.bf16.msra.mxu0 0
    %237 = vmatprep.subr.bf16.mxu0 0
    %238 = vmatpush1.bf16.msra.mxu0 0
    %239 = vmatprep.subr.bf16.mxu0 0
    %240 = vmatpush1.bf16.msra.mxu0 0
    %241 = vmatprep.subr.bf16.mxu0 0
    %242 = vmatpush1.bf16.msra.mxu0 0
    %243 = vmatprep.mubr.bf16.mxu0 0
    %244 = vmatmul.mubr.bf16.gmra.mrb[0].mxu0 %v139
    %v245 = vpop.f32.mrb[0].mxu0
    %v246 = vadd.f32 %v161, %v245
    %v247 = vpop.f32.mrb[0].mxu0
    %v248 = vpop.f32.mrb[0].mxu0
    %v249 = vpop.f32.mrb[0].mxu0
    %250 = vdwg.mxu0
    %v251 = vmax.f32 %v246, 0.0
    %v252 = vpack.c.bf16 %v251, %v251
    %v253 = vld [vmem:[#allocation7] sm:$0xf]
    %v254 = vld [vmem:[#allocation7 + $0x4] sm:$0xf]
    %v255 = vld [vmem:[#allocation7 + $0x8] sm:$0xf]
    %v256 = vld [vmem:[#allocation7 + $0xc] sm:$0xf]
    %v257 = vld [vmem:[#allocation7 + $0x10] sm:$0xf]
    %v258 = vld [vmem:[#allocation7 + $0x14] sm:$0xf]
    %v259 = vld [vmem:[#allocation7 + $0x18] sm:$0xf]
    %v260 = vld [vmem:[#allocation7 + $0x1c] sm:$0xf]
    %v261 = vld [vmem:[#allocation7 + $0x20] sm:$0xf]
    %v262 = vld [vmem:[#allocation7 + $0x24] sm:$0xf]
    %v263 = vld [vmem:[#allocation7 + $0x28] sm:$0xf]
    %v264 = vld [vmem:[#allocation7 + $0x2c] sm:$0xf]
    %v265 = vld [vmem:[#allocation7 + $0x30] sm:$0xf]
    %v266 = vld [vmem:[#allocation7 + $0x34] sm:$0xf]
    %v267 = vld [vmem:[#allocation7 + $0x38] sm:$0xf]
    %v268 = vld [vmem:[#allocation7 + $0x3c] sm:$0xf]
    %v269 = vld [vmem:[%s4] sm:$0x1]
    %v271 = vlaneseq
    %v272 = vshrl.u32 %v271, 7
    %v273 = vsub.s32 0, %v272
    %v274 = vrot.slane %v269, %v273
    %v292 = vunpack.c.l.b16 %v253
    %v293 = vunpack.c.l.b16 %v254
    %v294 = vunpack.c.l.b16 %v255
    %v295 = vunpack.c.l.b16 %v256
    %v296 = vunpack.c.l.b16 %v257
    %v297 = vunpack.c.l.b16 %v258
    %v298 = vunpack.c.l.b16 %v259
    %v299 = vunpack.c.l.b16 %v260
    %v300 = vunpack.c.l.b16 %v261
    %v301 = vunpack.c.l.b16 %v262
    %v302 = vunpack.c.l.b16 %v263
    %v303 = vunpack.c.l.b16 %v264
    %v304 = vunpack.c.l.b16 %v265
    %v305 = vunpack.c.l.b16 %v266
    %v306 = vunpack.c.l.b16 %v267
    %v307 = vunpack.c.l.b16 %v268
    %v308 = vpack.c.b16 %v293, %v292
    %v309 = vpack.c.b16 %v295, %v294
    %v310 = vpack.c.b16 %v297, %v296
    %v311 = vpack.c.b16 %v299, %v298
    %v312 = vpack.c.b16 %v301, %v300
    %v313 = vpack.c.b16 %v303, %v302
    %v314 = vpack.c.b16 %v305, %v304
    %v315 = vpack.c.b16 %v307, %v306
    %324 = vmatprep.subr.bf16.mxu0 0
    %325 = vmatpush1.bf16.msra.mxu0 %v308
    %326 = vmatprep.subr.bf16.mxu0 0
    %327 = vmatpush1.bf16.msra.mxu0 %v309
    %328 = vmatprep.subr.bf16.mxu0 0
    %329 = vmatpush1.bf16.msra.mxu0 %v310
    %330 = vmatprep.subr.bf16.mxu0 0
    %331 = vmatpush1.bf16.msra.mxu0 %v311
    %332 = vmatprep.subr.bf16.mxu0 0
    %333 = vmatpush1.bf16.msra.mxu0 %v312
    %334 = vmatprep.subr.bf16.mxu0 0
    %335 = vmatpush1.bf16.msra.mxu0 %v313
    %336 = vmatprep.subr.bf16.mxu0 0
    %337 = vmatpush1.bf16.msra.mxu0 %v314
    %338 = vmatprep.subr.bf16.mxu0 0
    %339 = vmatpush1.bf16.msra.mxu0 %v315
    %340 = vmatprep.subr.bf16.mxu0 0
    %341 = vmatpush1.bf16.msra.mxu0 0
    %342 = vmatprep.subr.bf16.mxu0 0
    %343 = vmatpush1.bf16.msra.mxu0 0
    %344 = vmatprep.subr.bf16.mxu0 0
    %345 = vmatpush1.bf16.msra.mxu0 0
    %346 = vmatprep.subr.bf16.mxu0 0
    %347 = vmatpush1.bf16.msra.mxu0 0
    %348 = vmatprep.subr.bf16.mxu0 0
    %349 = vmatpush1.bf16.msra.mxu0 0
    %350 = vmatprep.subr.bf16.mxu0 0
    %351 = vmatpush1.bf16.msra.mxu0 0
    %352 = vmatprep.subr.bf16.mxu0 0
    %353 = vmatpush1.bf16.msra.mxu0 0
    %354 = vmatprep.subr.bf16.mxu0 0
    %355 = vmatpush1.bf16.msra.mxu0 0
    %356 = vmatprep.mubr.bf16.mxu0 0
    %357 = vmatmul.mubr.bf16.gmra.mrb[0].mxu0 %v252
    %v358 = vpop.f32.mrb[0].mxu0
    %v359 = vadd.f32 %v274, %v358
    %v360 = vpop.f32.mrb[0].mxu0
    %v361 = vpop.f32.mrb[0].mxu0
    %v362 = vpop.f32.mrb[0].mxu0
    %363 = vdwg.mxu0
    %v364 = vmax.f32 %v359, 0.0
    %v365 = vpack.c.bf16 %v364, %v364
    %v366 = vld [vmem:[#allocation8] sm:$0xf]
    %v367 = vld [vmem:[#allocation8 + $0x4] sm:$0xf]
    %v368 = vld [vmem:[#allocation8 + $0x8] sm:$0xf]
    %v369 = vld [vmem:[#allocation8 + $0xc] sm:$0xf]
    %v370 = vld [vmem:[#allocation8 + $0x10] sm:$0xf]
    %v371 = vld [vmem:[#allocation8 + $0x14] sm:$0xf]
    %v372 = vld [vmem:[#allocation8 + $0x18] sm:$0xf]
    %v373 = vld [vmem:[#allocation8 + $0x1c] sm:$0xf]
    %v374 = vld [vmem:[#allocation8 + $0x20] sm:$0xf]
    %v375 = vld [vmem:[#allocation8 + $0x24] sm:$0xf]
    %v376 = vld [vmem:[#allocation8 + $0x28] sm:$0xf]
    %v377 = vld [vmem:[#allocation8 + $0x2c] sm:$0xf]
    %v378 = vld [vmem:[#allocation8 + $0x30] sm:$0xf]
    %v379 = vld [vmem:[#allocation8 + $0x34] sm:$0xf]
    %v380 = vld [vmem:[#allocation8 + $0x38] sm:$0xf]
    %v381 = vld [vmem:[#allocation8 + $0x3c] sm:$0xf]
    %v382 = vld [vmem:[%s6] sm:$0x1]
    %v384 = vlaneseq
    %v385 = vshrl.u32 %v384, 7
    %v386 = vsub.s32 0, %v385
    %v387 = vrot.slane %v382, %v386
    %v405 = vunpack.c.l.b16 %v366
    %v406 = vunpack.c.l.b16 %v367
    %v407 = vunpack.c.l.b16 %v368
    %v408 = vunpack.c.l.b16 %v369
    %v409 = vunpack.c.l.b16 %v370
    %v410 = vunpack.c.l.b16 %v371
    %v411 = vunpack.c.l.b16 %v372
    %v412 = vunpack.c.l.b16 %v373
    %v413 = vunpack.c.l.b16 %v374
    %v414 = vunpack.c.l.b16 %v375
    %v415 = vunpack.c.l.b16 %v376
    %v416 = vunpack.c.l.b16 %v377
    %v417 = vunpack.c.l.b16 %v378
    %v418 = vunpack.c.l.b16 %v379
    %v419 = vunpack.c.l.b16 %v380
    %v420 = vunpack.c.l.b16 %v381
    %v421 = vpack.c.b16 %v406, %v405
    %v422 = vpack.c.b16 %v408, %v407
    %v423 = vpack.c.b16 %v410, %v409
    %v424 = vpack.c.b16 %v412, %v411
    %v425 = vpack.c.b16 %v414, %v413
    %v426 = vpack.c.b16 %v416, %v415
    %v427 = vpack.c.b16 %v418, %v417
    %v428 = vpack.c.b16 %v420, %v419
    %437 = vmatprep.subr.bf16.mxu0 0
    %438 = vmatpush1.bf16.msra.mxu0 %v421
    %439 = vmatprep.subr.bf16.mxu0 0
    %440 = vmatpush1.bf16.msra.mxu0 %v422
    %441 = vmatprep.subr.bf16.mxu0 0
    %442 = vmatpush1.bf16.msra.mxu0 %v423
    %443 = vmatprep.subr.bf16.mxu0 0
    %444 = vmatpush1.bf16.msra.mxu0 %v424
    %445 = vmatprep.subr.bf16.mxu0 0
    %446 = vmatpush1.bf16.msra.mxu0 %v425
    %447 = vmatprep.subr.bf16.mxu0 0
    %448 = vmatpush1.bf16.msra.mxu0 %v426
    %449 = vmatprep.subr.bf16.mxu0 0
    %450 = vmatpush1.bf16.msra.mxu0 %v427
    %451 = vmatprep.subr.bf16.mxu0 0
    %452 = vmatpush1.bf16.msra.mxu0 %v428
    %453 = vmatprep.subr.bf16.mxu0 0
    %454 = vmatpush1.bf16.msra.mxu0 0
    %455 = vmatprep.subr.bf16.mxu0 0
    %456 = vmatpush1.bf16.msra.mxu0 0
    %457 = vmatprep.subr.bf16.mxu0 0
    %458 = vmatpush1.bf16.msra.mxu0 0
    %459 = vmatprep.subr.bf16.mxu0 0
    %460 = vmatpush1.bf16.msra.mxu0 0
    %461 = vmatprep.subr.bf16.mxu0 0
    %462 = vmatpush1.bf16.msra.mxu0 0
    %463 = vmatprep.subr.bf16.mxu0 0
    %464 = vmatpush1.bf16.msra.mxu0 0
    %465 = vmatprep.subr.bf16.mxu0 0
    %466 = vmatpush1.bf16.msra.mxu0 0
    %467 = vmatprep.subr.bf16.mxu0 0
    %468 = vmatpush1.bf16.msra.mxu0 0
    %469 = vmatprep.mubr.bf16.mxu0 0
    %470 = vmatmul.mubr.bf16.gmra.mrb[0].mxu0 %v365
    %v471 = vpop.f32.mrb[0].mxu0
    %v472 = vadd.f32 %v387, %v471
    %v473 = vpop.f32.mrb[0].mxu0
    %v474 = vpop.f32.mrb[0].mxu0
    %v475 = vpop.f32.mrb[0].mxu0
    %476 = vdwg.mxu0
    %v477 = vunpack.c.l.bf16 %v252
    %v478 = vadd.f32 %v472, %v477
    %v479 = vmax.f32 %v478, 0.0
    %v480 = vpack.c.bf16 %v479, %v479
    %v481 = vld [vmem:[#allocation10] sm:$0xf]
    %v482 = vld [vmem:[#allocation10 + $0x4] sm:$0xf]
    %v483 = vld [vmem:[#allocation10 + $0x8] sm:$0xf]
    %v484 = vld [vmem:[#allocation10 + $0xc] sm:$0xf]
    %v485 = vld [vmem:[#allocation10 + $0x10] sm:$0xf]
    %v486 = vld [vmem:[#allocation10 + $0x14] sm:$0xf]
    %v487 = vld [vmem:[#allocation10 + $0x18] sm:$0xf]
    %v488 = vld [vmem:[#allocation10 + $0x1c] sm:$0xf]
    %v489 = vld [vmem:[#allocation10 + $0x20] sm:$0xf]
    %v490 = vld [vmem:[#allocation10 + $0x24] sm:$0xf]
    %v491 = vld [vmem:[#allocation10 + $0x28] sm:$0xf]
    %v492 = vld [vmem:[#allocation10 + $0x2c] sm:$0xf]
    %v493 = vld [vmem:[#allocation10 + $0x30] sm:$0xf]
    %v494 = vld [vmem:[#allocation10 + $0x34] sm:$0xf]
    %v495 = vld [vmem:[#allocation10 + $0x38] sm:$0xf]
    %v496 = vld [vmem:[#allocation10 + $0x3c] sm:$0xf]
    %v497 = vld [vmem:[%s8] sm:$0x1]
    %v499 = vlaneseq
    %v500 = vshrl.u32 %v499, 7
    %v501 = vsub.s32 0, %v500
    %v502 = vrot.slane %v497, %v501
    %v520 = vunpack.c.l.b16 %v481
    %v521 = vunpack.c.l.b16 %v482
    %v522 = vunpack.c.l.b16 %v483
    %v523 = vunpack.c.l.b16 %v484
    %v524 = vunpack.c.l.b16 %v485
    %v525 = vunpack.c.l.b16 %v486
    %v526 = vunpack.c.l.b16 %v487
    %v527 = vunpack.c.l.b16 %v488
    %v528 = vunpack.c.l.b16 %v489
    %v529 = vunpack.c.l.b16 %v490
    %v530 = vunpack.c.l.b16 %v491
    %v531 = vunpack.c.l.b16 %v492
    %v532 = vunpack.c.l.b16 %v493
    %v533 = vunpack.c.l.b16 %v494
    %v534 = vunpack.c.l.b16 %v495
    %v535 = vunpack.c.l.b16 %v496
    %v536 = vpack.c.b16 %v521, %v520
    %v537 = vpack.c.b16 %v523, %v522
    %v538 = vpack.c.b16 %v525, %v524
    %v539 = vpack.c.b16 %v527, %v526
    %v540 = vpack.c.b16 %v529, %v528
    %v541 = vpack.c.b16 %v531, %v530
    %v542 = vpack.c.b16 %v533, %v532
    %v543 = vpack.c.b16 %v535, %v534
    %552 = vmatprep.subr.bf16.mxu0 0
    %553 = vmatpush1.bf16.msra.mxu0 %v536
    %554 = vmatprep.subr.bf16.mxu0 0
    %555 = vmatpush1.bf16.msra.mxu0 %v537
    %556 = vmatprep.subr.bf16.mxu0 0
    %557 = vmatpush1.bf16.msra.mxu0 %v538
    %558 = vmatprep.subr.bf16.mxu0 0
    %559 = vmatpush1.bf16.msra.mxu0 %v539
    %560 = vmatprep.subr.bf16.mxu0 0
    %561 = vmatpush1.bf16.msra.mxu0 %v540
    %562 = vmatprep.subr.bf16.mxu0 0
    %563 = vmatpush1.bf16.msra.mxu0 %v541
    %564 = vmatprep.subr.bf16.mxu0 0
    %565 = vmatpush1.bf16.msra.mxu0 %v542
    %566 = vmatprep.subr.bf16.mxu0 0
    %567 = vmatpush1.bf16.msra.mxu0 %v543
    %568 = vmatprep.subr.bf16.mxu0 0
    %569 = vmatpush1.bf16.msra.mxu0 0
    %570 = vmatprep.subr.bf16.mxu0 0
    %571 = vmatpush1.bf16.msra.mxu0 0
    %572 = vmatprep.subr.bf16.mxu0 0
    %573 = vmatpush1.bf16.msra.mxu0 0
    %574 = vmatprep.subr.bf16.mxu0 0
    %575 = vmatpush1.bf16.msra.mxu0 0
    %576 = vmatprep.subr.bf16.mxu0 0
    %577 = vmatpush1.bf16.msra.mxu0 0
    %578 = vmatprep.subr.bf16.mxu0 0
    %579 = vmatpush1.bf16.msra.mxu0 0
    %580 = vmatprep.subr.bf16.mxu0 0
    %581 = vmatpush1.bf16.msra.mxu0 0
    %582 = vmatprep.subr.bf16.mxu0 0
    %583 = vmatpush1.bf16.msra.mxu0 0
    %584 = vmatprep.mubr.bf16.mxu0 0
    %585 = vmatmul.mubr.bf16.gmra.mrb[0].mxu0 %v480
    %v586 = vpop.f32.mrb[0].mxu0
    %v587 = vadd.f32 %v502, %v586
    %v588 = vpop.f32.mrb[0].mxu0
    %v589 = vpop.f32.mrb[0].mxu0
    %v590 = vpop.f32.mrb[0].mxu0
    %591 = vdwg.mxu0
    %v592 = vmax.f32 %v587, 0.0
    %v593 = vpack.c.bf16 %v592, %v592
    %v594 = vld [vmem:[#allocation11] sm:$0xf]
    %v595 = vld [vmem:[#allocation11 + $0x4] sm:$0xf]
    %v596 = vld [vmem:[#allocation11 + $0x8] sm:$0xf]
    %v597 = vld [vmem:[#allocation11 + $0xc] sm:$0xf]
    %v598 = vld [vmem:[#allocation11 + $0x10] sm:$0xf]
    %v599 = vld [vmem:[#allocation11 + $0x14] sm:$0xf]
    %v600 = vld [vmem:[#allocation11 + $0x18] sm:$0xf]
    %v601 = vld [vmem:[#allocation11 + $0x1c] sm:$0xf]
    %v602 = vld [vmem:[#allocation11 + $0x20] sm:$0xf]
    %v603 = vld [vmem:[#allocation11 + $0x24] sm:$0xf]
    %v604 = vld [vmem:[#allocation11 + $0x28] sm:$0xf]
    %v605 = vld [vmem:[#allocation11 + $0x2c] sm:$0xf]
    %v606 = vld [vmem:[#allocation11 + $0x30] sm:$0xf]
    %v607 = vld [vmem:[#allocation11 + $0x34] sm:$0xf]
    %v608 = vld [vmem:[#allocation11 + $0x38] sm:$0xf]
    %v609 = vld [vmem:[#allocation11 + $0x3c] sm:$0xf]
    %v610 = vld [vmem:[%s10] sm:$0x1]
    %v612 = vlaneseq
    %v613 = vshrl.u32 %v612, 7
    %v614 = vsub.s32 0, %v613
    %v615 = vrot.slane %v610, %v614
    %v633 = vunpack.c.l.b16 %v594
    %v634 = vunpack.c.l.b16 %v595
    %v635 = vunpack.c.l.b16 %v596
    %v636 = vunpack.c.l.b16 %v597
    %v637 = vunpack.c.l.b16 %v598
    %v638 = vunpack.c.l.b16 %v599
    %v639 = vunpack.c.l.b16 %v600
    %v640 = vunpack.c.l.b16 %v601
    %v641 = vunpack.c.l.b16 %v602
    %v642 = vunpack.c.l.b16 %v603
    %v643 = vunpack.c.l.b16 %v604
    %v644 = vunpack.c.l.b16 %v605
    %v645 = vunpack.c.l.b16 %v606
    %v646 = vunpack.c.l.b16 %v607
    %v647 = vunpack.c.l.b16 %v608
    %v648 = vunpack.c.l.b16 %v609
    %v649 = vpack.c.b16 %v634, %v633
    %v650 = vpack.c.b16 %v636, %v635
    %v651 = vpack.c.b16 %v638, %v637
    %v652 = vpack.c.b16 %v640, %v639
    %v653 = vpack.c.b16 %v642, %v641
    %v654 = vpack.c.b16 %v644, %v643
    %v655 = vpack.c.b16 %v646, %v645
    %v656 = vpack.c.b16 %v648, %v647
    %665 = vmatprep.subr.bf16.mxu0 0
    %666 = vmatpush1.bf16.msra.mxu0 %v649
    %667 = vmatprep.subr.bf16.mxu0 0
    %668 = vmatpush1.bf16.msra.mxu0 %v650
    %669 = vmatprep.subr.bf16.mxu0 0
    %670 = vmatpush1.bf16.msra.mxu0 %v651
    %671 = vmatprep.subr.bf16.mxu0 0
    %672 = vmatpush1.bf16.msra.mxu0 %v652
    %673 = vmatprep.subr.bf16.mxu0 0
    %674 = vmatpush1.bf16.msra.mxu0 %v653
    %675 = vmatprep.subr.bf16.mxu0 0
    %676 = vmatpush1.bf16.msra.mxu0 %v654
    %677 = vmatprep.subr.bf16.mxu0 0
    %678 = vmatpush1.bf16.msra.mxu0 %v655
    %679 = vmatprep.subr.bf16.mxu0 0
    %680 = vmatpush1.bf16.msra.mxu0 %v656
    %681 = vmatprep.subr.bf16.mxu0 0
    %682 = vmatpush1.bf16.msra.mxu0 0
    %683 = vmatprep.subr.bf16.mxu0 0
    %684 = vmatpush1.bf16.msra.mxu0 0
    %685 = vmatprep.subr.bf16.mxu0 0
    %686 = vmatpush1.bf16.msra.mxu0 0
    %687 = vmatprep.subr.bf16.mxu0 0
    %688 = vmatpush1.bf16.msra.mxu0 0
    %689 = vmatprep.subr.bf16.mxu0 0
    %690 = vmatpush1.bf16.msra.mxu0 0
    %691 = vmatprep.subr.bf16.mxu0 0
    %692 = vmatpush1.bf16.msra.mxu0 0
    %693 = vmatprep.subr.bf16.mxu0 0
    %694 = vmatpush1.bf16.msra.mxu0 0
    %695 = vmatprep.subr.bf16.mxu0 0
    %696 = vmatpush1.bf16.msra.mxu0 0
    %697 = vmatprep.mubr.bf16.mxu0 0
    %698 = vmatmul.mubr.bf16.gmra.mrb[0].mxu0 %v593
    %v699 = vpop.f32.mrb[0].mxu0
    %v700 = vadd.f32 %v615, %v699
    %v701 = vpop.f32.mrb[0].mxu0
    %v702 = vpop.f32.mrb[0].mxu0
    %v703 = vpop.f32.mrb[0].mxu0
    %704 = vdwg.mxu0
    %v705 = vunpack.c.l.bf16 %v480
    %v706 = vadd.f32 %v700, %v705
    %v707 = vmax.f32 %v706, 0.0
    %v708 = vpack.c.bf16 %v707, %v707
    %v709 = vld [vmem:[#allocation13] sm:$0xf]
    %v710 = vld [vmem:[#allocation13 + $0x4] sm:$0xf]
    %v711 = vld [vmem:[#allocation13 + $0x8] sm:$0xf]
    %v712 = vld [vmem:[#allocation13 + $0xc] sm:$0xf]
    %v713 = vld [vmem:[#allocation13 + $0x10] sm:$0xf]
    %v714 = vld [vmem:[#allocation13 + $0x14] sm:$0xf]
    %v715 = vld [vmem:[#allocation13 + $0x18] sm:$0xf]
    %v716 = vld [vmem:[#allocation13 + $0x1c] sm:$0xf]
    %v717 = vld [vmem:[#allocation13 + $0x20] sm:$0xf]
    %v718 = vld [vmem:[#allocation13 + $0x24] sm:$0xf]
    %v719 = vld [vmem:[#allocation13 + $0x28] sm:$0xf]
    %v720 = vld [vmem:[#allocation13 + $0x2c] sm:$0xf]
    %v721 = vld [vmem:[#allocation13 + $0x30] sm:$0xf]
    %v722 = vld [vmem:[#allocation13 + $0x34] sm:$0xf]
    %v723 = vld [vmem:[#allocation13 + $0x38] sm:$0xf]
    %v724 = vld [vmem:[#allocation13 + $0x3c] sm:$0xf]
    %v725 = vld [vmem:[%s12] sm:$0x1]
    %v727 = vlaneseq
    %v728 = vshrl.u32 %v727, 7
    %v729 = vsub.s32 0, %v728
    %v730 = vrot.slane %v725, %v729
    %v748 = vunpack.c.l.b16 %v709
    %v749 = vunpack.c.l.b16 %v710
    %v750 = vunpack.c.l.b16 %v711
    %v751 = vunpack.c.l.b16 %v712
    %v752 = vunpack.c.l.b16 %v713
    %v753 = vunpack.c.l.b16 %v714
    %v754 = vunpack.c.l.b16 %v715
    %v755 = vunpack.c.l.b16 %v716
    %v756 = vunpack.c.l.b16 %v717
    %v757 = vunpack.c.l.b16 %v718
    %v758 = vunpack.c.l.b16 %v719
    %v759 = vunpack.c.l.b16 %v720
    %v760 = vunpack.c.l.b16 %v721
    %v761 = vunpack.c.l.b16 %v722
    %v762 = vunpack.c.l.b16 %v723
    %v763 = vunpack.c.l.b16 %v724
    %v764 = vpack.c.b16 %v749, %v748
    %v765 = vpack.c.b16 %v751, %v750
    %v766 = vpack.c.b16 %v753, %v752
    %v767 = vpack.c.b16 %v755, %v754
    %v768 = vpack.c.b16 %v757, %v756
    %v769 = vpack.c.b16 %v759, %v758
    %v770 = vpack.c.b16 %v761, %v760
    %v771 = vpack.c.b16 %v763, %v762
    %780 = vmatprep.subr.bf16.mxu0 0
    %781 = vmatpush1.bf16.msra.mxu0 %v764
    %782 = vmatprep.subr.bf16.mxu0 0
    %783 = vmatpush1.bf16.msra.mxu0 %v765
    %784 = vmatprep.subr.bf16.mxu0 0
    %785 = vmatpush1.bf16.msra.mxu0 %v766
    %786 = vmatprep.subr.bf16.mxu0 0
    %787 = vmatpush1.bf16.msra.mxu0 %v767
    %788 = vmatprep.subr.bf16.mxu0 0
    %789 = vmatpush1.bf16.msra.mxu0 %v768
    %790 = vmatprep.subr.bf16.mxu0 0
    %791 = vmatpush1.bf16.msra.mxu0 %v769
    %792 = vmatprep.subr.bf16.mxu0 0
    %793 = vmatpush1.bf16.msra.mxu0 %v770
    %794 = vmatprep.subr.bf16.mxu0 0
    %795 = vmatpush1.bf16.msra.mxu0 %v771
    %796 = vmatprep.subr.bf16.mxu0 0
    %797 = vmatpush1.bf16.msra.mxu0 0
    %798 = vmatprep.subr.bf16.mxu0 0
    %799 = vmatpush1.bf16.msra.mxu0 0
    %800 = vmatprep.subr.bf16.mxu0 0
    %801 = vmatpush1.bf16.msra.mxu0 0
    %802 = vmatprep.subr.bf16.mxu0 0
    %803 = vmatpush1.bf16.msra.mxu0 0
    %804 = vmatprep.subr.bf16.mxu0 0
    %805 = vmatpush1.bf16.msra.mxu0 0
    %806 = vmatprep.subr.bf16.mxu0 0
    %807 = vmatpush1.bf16.msra.mxu0 0
    %808 = vmatprep.subr.bf16.mxu0 0
    %809 = vmatpush1.bf16.msra.mxu0 0
    %810 = vmatprep.subr.bf16.mxu0 0
    %811 = vmatpush1.bf16.msra.mxu0 0
    %812 = vmatprep.mubr.bf16.mxu0 0
    %813 = vmatmul.mubr.bf16.gmra.mrb[0].mxu0 %v708
    %v814 = vpop.f32.mrb[0].mxu0
    %v815 = vadd.f32 %v730, %v814
    %v816 = vpop.f32.mrb[0].mxu0
    %v817 = vpop.f32.mrb[0].mxu0
    %v818 = vpop.f32.mrb[0].mxu0
    %819 = vdwg.mxu0
    %v820 = vpack.c.bf16 %v815, %v815
    %821 = vst [vmem:[#allocation14] sm:$0xf] %v820
    // Predicated region
    $region82: #{tpu_custom_call.1} parent=1 // pred_check
      _
    $region83: #{tpu_custom_call.1} parent=1 // pred_check_branch
      %823 = sbr.rel (0) target = $region85
    $region84: #{tpu_custom_call.1} parent=1 // pred_region
      %s825 = ssub.s32 64, 64
      %826 = vsyncadd [#allocation4], %s825
      %s828 = sshll.u32 [#allocation14], 4
      %s829 = int_to_ptr.vmem [resolvable:$true] %s828
      %831 = dma.vmem_to_hbm [thread:$0]  %s829, 64, %s13, [#allocation4]
    $region85: #{tpu_custom_call.1} parent=1 // pred_fallthru
      _
    // Predicated region
    $region86: #{tpu_custom_call.1} parent=1 // pred_check
      _
    $region87: #{tpu_custom_call.1} parent=1 // pred_check_branch
      %833 = sbr.rel (0) target = $region89
    $region88: #{tpu_custom_call.1} parent=1 // pred_region
      %834 = dma.done [#allocation4], 64
    $region89: #{tpu_custom_call.1} parent=1 // pred_fallthru
      _
    %835 = vsyncpa [#allocation3], 1
    %836 = vsyncpa [#allocation6], 1
    %837 = vsyncpa [#allocation9], 1
    %838 = vsyncpa [#allocation12], 1
    %839 = vsyncpa [#allocation4], 1

</llo_original>
